<compile_context>
chip_gen: v7x
topology: tpu7x:2x2x1
jax: 0.10.0
libtpu: 0.0.40
codegen_flags: <defaults>
</compile_context>

<pallas_src>
import jax
import jax.numpy as jnp
from jax import lax
from jax.experimental import pallas as pl
from jax.experimental.pallas import tpu as pltpu


def _make_kernel(bn, C, F, D, compute_dtype, use_expansion):
    K = C * D
    L = D * D
    cdt = compute_dtype

    def kernel(x_ref, wr_ref, wc_ref, b_ref, o_ref):
        # x_ref : (bn, C, D, D)  caller dtype (cast in-kernel, rides slack VPU slots)
        # wr_ref: (F, C*D) cdt   Wr[f, c*D + j]   (conv_row, kernel (1, D))
        # wc_ref: (F, C*D) cdt   Wc[f, c*D + i]   (conv_col, kernel (D, 1))
        # b_ref : (F, 1)   f32   br + bc
        # o_ref : (bn, F, D*D)   [expansion]  or  (bn, F, D, D)  [broadcast]
        x = x_ref[...]

        # conv_col operand: contraction index k = c*D + i is already contiguous.
        x_col = x.astype(cdt).reshape(bn, K, D)                      # (bn, K, D_j)

        # conv_row operand: swap the two minor dims (cheap batched (D, D) XLU
        # transposes) so k = c*D + j becomes contiguous as well.
        x_t = jnp.swapaxes(x.reshape(bn * C, D, D), 1, 2)            # (bn*C, D_j, D_i)
        x_row = x_t.astype(cdt).reshape(bn, K, D)                    # (bn, K, D_i)

        # One batched dot_general per conv: BN as the batch dim, C folded into K.
        wr = jnp.broadcast_to(wr_ref[...][None], (bn, F, K))
        wc = jnp.broadcast_to(wc_ref[...][None], (bn, F, K))
        dn = (((2,), (1,)), ((0,), (0,)))
        row = lax.dot_general(wr, x_row, dn,
                              preferred_element_type=jnp.float32)    # (bn, F, D_i)
        col = lax.dot_general(wc, x_col, dn,
                              preferred_element_type=jnp.float32)    # (bn, F, D_j)
        col = col + b_ref[...][None]        # fold (br + bc) exactly once, in f32

        if use_expansion:
            # Small-D path: lane-dense flat output via ONE fused one-hot
            # expansion matmul.  Expansion matrix built in-kernel from iotas:
            #   e[r, i*D + j] = (r < D  and r == i)  or  (r >= D and r - D == j)
            r3 = lax.broadcasted_iota(jnp.int32, (2 * D, D, D), 0)
            i3 = lax.broadcasted_iota(jnp.int32, (2 * D, D, D), 1)
            j3 = lax.broadcasted_iota(jnp.int32, (2 * D, D, D), 2)
            hit = ((r3 < D) & (r3 == i3)) | ((r3 >= D) & ((r3 - D) == j3))
            e = hit.astype(jnp.float32).reshape(2 * D, L).astype(cdt)   # (2D, D*D)

            rc = jnp.concatenate([row, col], axis=-1)                # (bn, F, 2D) f32
            rc = rc.astype(cdt).reshape(bn * F, 2 * D)
            flat = jnp.dot(rc, e, preferred_element_type=jnp.float32)   # (bn*F, L)
            o_ref[...] = flat.reshape(bn, F, L).astype(o_ref.dtype)
        else:
            # Large-D path: last dim is already lane-dense; broadcast-add on the
            # VPU, skipping the O(D^3) expansion operands entirely.
            out = row[:, :, :, None] + col[:, :, None, :]            # (bn, F, D, D)
            o_ref[...] = out.astype(o_ref.dtype)

    return kernel


def _vmem_budget_bytes():
    """Per-generation usable VMEM (v5e/v6e: 128 MiB parts, v7x: 64 MiB)."""
    try:
        cap = int(pltpu.get_tpu_info().vmem_capacity_bytes)
    except Exception:
        cap = 64 << 20                      # conservative (v7x-sized) fallback
    return (cap * 3) // 4                   # headroom for compiler scratch


def _pick_block_n(n, c, f, d, x_itemsize, out_itemsize, cdt_itemsize,
                  use_expansion, vmem_budget, per_step_io_target=4 << 20):
    """Fused-batch size per grid step, sized by BYTES (not lanes): ~4 MiB of
    pipelined HBM<->VMEM traffic per step, bounded by the VMEM budget.  No
    artificial ">=2 grid steps" rule: large problems naturally get many steps,
    micro-batches run in a single step."""
    l = d * d
    per_sample_io = c * l * x_itemsize + f * l * out_itemsize
    per_sample_tmp = 2 * c * l * cdt_itemsize + 4 * f * d * 4 + f * l * 4
    const = 2 * f * c * d * cdt_itemsize + f * 4
    if use_expansion:
        const += 2 * d * l * (cdt_itemsize + 4)      # in-kernel e (+ iota temps)

    bn = int(max(1, min(n, per_step_io_target // max(per_sample_io, 1))))

    def vmem_need(b):
        # double-buffered streams + body temporaries + constants + headroom
        return 2 * b * per_sample_io + b * per_sample_tmp + 2 * const + (2 << 20)

    while bn > 1 and vmem_need(bn) > vmem_budget:
        bn = max(1, bn // 2)
    limit = int(min(max(vmem_need(bn), 8 << 20), max(vmem_budget, 8 << 20)))
    return bn, limit


def edge2edge_pallas(x, w_row, b_row, w_col, b_col, *,
                     compute_dtype=jnp.bfloat16, out_dtype=None,
                     use_expansion=None):
    """x: (N, C, D, D);  w_row: (F, C, 1, D);  w_col: (F, C, D, 1).  Returns (N, F, D, D)."""
    N, C, D, D2 = x.shape
    assert D == D2, "adjacency input must be square"
    F = w_row.shape[0]
    out_dtype = jnp.dtype(x.dtype) if out_dtype is None else jnp.dtype(out_dtype)
    cdt = jnp.dtype(compute_dtype)
    if use_expansion is None:
        # One-hot lane expansion only pays while the raw last dim is badly
        # lane-sparse AND its O(D^3) MXU/VMEM cost stays small next to the convs.
        use_expansion = D < 64

    # Flattened cross-filter weights: contraction index k = c*D + (j | i).
    wr_flat = w_row.reshape(F, C * D).astype(cdt)
    wc_flat = w_col.reshape(F, C * D).astype(cdt)
    bias = (b_row + b_col).reshape(F, 1).astype(jnp.float32)

    vmem_budget = _vmem_budget_bytes()
    bn, vmem_limit = _pick_block_n(
        N, C, F, D, jnp.dtype(x.dtype).itemsize, out_dtype.itemsize,
        cdt.itemsize, use_expansion, vmem_budget)

    # Pad the batch to a multiple of bn instead of shrinking bn for awkward N.
    n_pad = int(pl.cdiv(N, bn) * bn)
    x_in = x if n_pad == N else jnp.pad(x, ((0, n_pad - N), (0, 0), (0, 0), (0, 0)))

    kernel = _make_kernel(bn, C, F, D, cdt, use_expansion)

    if use_expansion:
        out_shape = jax.ShapeDtypeStruct((n_pad, F, D * D), out_dtype)
        out_spec = pl.BlockSpec((bn, F, D * D), lambda g: (g, 0, 0))
    else:
        out_shape = jax.ShapeDtypeStruct((n_pad, F, D, D), out_dtype)
        out_spec = pl.BlockSpec((bn, F, D, D), lambda g: (g, 0, 0, 0))

    out = pl.pallas_call(
        kernel,
        out_shape=out_shape,
        grid_spec=pltpu.PrefetchScalarGridSpec(
            num_scalar_prefetch=0,
            grid=(n_pad // bn,),
            in_specs=[
                pl.BlockSpec((bn, C, D, D), lambda g: (g, 0, 0, 0)),
                pl.BlockSpec((F, C * D), lambda g: (0, 0)),
                pl.BlockSpec((F, C * D), lambda g: (0, 0)),
                pl.BlockSpec((F, 1), lambda g: (0, 0)),
            ],
            out_specs=out_spec,
        ),
        compiler_params=pltpu.CompilerParams(
            dimension_semantics=("parallel",),
            vmem_limit_bytes=vmem_limit,
        ),
    )(x_in, wr_flat, wc_flat, bias)

    return out.reshape(n_pad, F, D, D)[:N]


def edge2edge_reference(x, w_row, b_row, w_col, b_col):
    # Pure-JAX reference for the two 1D convs + broadcast add.
    row = jnp.einsum('ncij,fcj->nfi', x, w_row[:, :, 0, :]) + b_row[None, :, None]
    col = jnp.einsum('ncij,fci->nfj', x, w_col[:, :, :, 0]) + b_col[None, :, None]
    return row[:, :, :, None] + col[:, :, None, :]


if __name__ == "__main__":
    # Small shapes consistent with the module: batch=2, in_channels=4,
    # filters=8, dim (nodes in the adjacency matrix) = 16.
    N, C, F, D = 2, 4, 8, 16

    key = jax.random.PRNGKey(0)
    kx, kwr, kbr, kwc, kbc = jax.random.split(key, 5)
    x = jax.random.normal(kx, (N, C, D, D), dtype=jnp.float32)
    # Deterministic synthetic parameters (shapes match nn.Conv2d in __init__).
    w_row = jax.random.normal(kwr, (F, C, 1, D), dtype=jnp.float32) * 0.1
    b_row = jax.random.normal(kbr, (F,), dtype=jnp.float32) * 0.1
    w_col = jax.random.normal(kwc, (F, C, D, 1), dtype=jnp.float32) * 0.1
    b_col = jax.random.normal(kbc, (F,), dtype=jnp.float32) * 0.1

    ref = edge2edge_reference(x, w_row, b_row, w_col, b_col)

    # f32 compute path (dtype-faithful to the PyTorch module), small-D expansion tail.
    out_f32 = jax.block_until_ready(
        edge2edge_pallas(x, w_row, b_row, w_col, b_col, compute_dtype=jnp.float32))
    assert out_f32.shape == (N, F, D, D), out_f32.shape
    assert jnp.allclose(out_f32, ref, atol=1e-4, rtol=1e-4), "f32 expansion path mismatch"

    # Default bf16 compute path (MXU-native operands, f32 accumulation).
    out_bf16 = jax.block_until_ready(edge2edge_pallas(x, w_row, b_row, w_col, b_col))
    assert out_bf16.shape == (N, F, D, D), out_bf16.shape
    assert jnp.allclose(out_bf16, ref, atol=5e-2, rtol=5e-2), "bf16 expansion path mismatch"

    # Large-D tail (VPU broadcast-add, no one-hot expansion), exercised here at
    # small D purely for correctness coverage of that branch.
    out_bc = jax.block_until_ready(
        edge2edge_pallas(x, w_row, b_row, w_col, b_col,
                         compute_dtype=jnp.float32, use_expansion=False))
    assert out_bc.shape == (N, F, D, D), out_bc.shape
    assert jnp.allclose(out_bc, ref, atol=1e-4, rtol=1e-4), "broadcast path mismatch"

    print("KERNEL_OK")
</pallas_src>

<mosaic_0001>
module attributes {stable_mosaic.version = 11 : i64} {
  func.func @kernel(%arg0: i32, %arg1: memref<2x4x16x16xf32, #tpu.memory_space<vmem>>, %arg2: memref<8x64xf32, #tpu.memory_space<vmem>>, %arg3: memref<8x64xf32, #tpu.memory_space<vmem>>, %arg4: memref<8x1xf32, #tpu.memory_space<vmem>>, %arg5: memref<2x8x256xf32, #tpu.memory_space<vmem>>) attributes {dimension_semantics = [#tpu.dimension_semantics<parallel>], iteration_bounds = array<i64: 1>, scalar_prefetch = 0 : i64, scratch_operands = 0 : i64, tpu.core_type = #tpu.core_type<tc>, window_params = [{transform_indices = @transform_0, window_bounds = array<i64: 2, 4, 16, 16>}, {pipeline_mode = #tpu.pipeline_mode<synchronous>, transform_indices = @transform_1, window_bounds = array<i64: 8, 64>}, {pipeline_mode = #tpu.pipeline_mode<synchronous>, transform_indices = @transform_2, window_bounds = array<i64: 8, 64>}, {pipeline_mode = #tpu.pipeline_mode<synchronous>, transform_indices = @transform_3, window_bounds = array<i64: 8, 1>}, {transform_indices = @transform_4, window_bounds = array<i64: 2, 8, 256>}]} {
    %c0 = arith.constant 0 : index
    %c0_0 = arith.constant 0 : index
    %c0_1 = arith.constant 0 : index
    %c0_2 = arith.constant 0 : index
    %0 = vector.load %arg1[%c0, %c0_0, %c0_1, %c0_2] : memref<2x4x16x16xf32, #tpu.memory_space<vmem>>, vector<2x4x16x16xf32>
    %1 = vector.shape_cast %0 : vector<2x4x16x16xf32> to vector<2x64x16xf32>
    %2 = vector.shape_cast %0 : vector<2x4x16x16xf32> to vector<8x16x16xf32>
    %3 = tpu.transpose %2, [0, 2, 1] : vector<8x16x16xf32> -> vector<8x16x16xf32>
    %4 = vector.shape_cast %3 : vector<8x16x16xf32> to vector<2x64x16xf32>
    %c0_3 = arith.constant 0 : index
    %c0_4 = arith.constant 0 : index
    %5 = vector.load %arg2[%c0_3, %c0_4] : memref<8x64xf32, #tpu.memory_space<vmem>>, vector<8x64xf32>
    %6 = vector.shape_cast %5 : vector<8x64xf32> to vector<1x8x64xf32>
    %7 = vector.shape_cast %6 : vector<1x8x64xf32> to vector<1x8x64xf32>
    %8 = vector.broadcast %7 : vector<1x8x64xf32> to vector<2x8x64xf32>
    %c0_5 = arith.constant 0 : index
    %c0_6 = arith.constant 0 : index
    %9 = vector.load %arg3[%c0_5, %c0_6] : memref<8x64xf32, #tpu.memory_space<vmem>>, vector<8x64xf32>
    %10 = vector.shape_cast %9 : vector<8x64xf32> to vector<1x8x64xf32>
    %11 = vector.shape_cast %10 : vector<1x8x64xf32> to vector<1x8x64xf32>
    %12 = vector.broadcast %11 : vector<1x8x64xf32> to vector<2x8x64xf32>
    %cst = arith.constant dense<0.000000e+00> : vector<2x8x16xf32>
    %13 = tpu.matmul %8, %4, %cst {dimension_numbers = #tpu.dot_dimension_numbers<[2], [1], [1], [2], [0, 0, 0, 1, 1, 2], [0], [0]>} : vector<2x8x64xf32>, vector<2x64x16xf32>, vector<2x8x16xf32> -> vector<2x8x16xf32>
    %cst_7 = arith.constant dense<0.000000e+00> : vector<2x8x16xf32>
    %14 = tpu.matmul %12, %1, %cst_7 {dimension_numbers = #tpu.dot_dimension_numbers<[2], [1], [1], [2], [0, 0, 0, 1, 1, 2], [0], [0]>} : vector<2x8x64xf32>, vector<2x64x16xf32>, vector<2x8x16xf32> -> vector<2x8x16xf32>
    %c0_8 = arith.constant 0 : index
    %c0_9 = arith.constant 0 : index
    %15 = vector.load %arg4[%c0_8, %c0_9] : memref<8x1xf32, #tpu.memory_space<vmem>>, vector<8x1xf32>
    %16 = vector.shape_cast %15 : vector<8x1xf32> to vector<1x8x1xf32>
    %17 = vector.broadcast %16 : vector<1x8x1xf32> to vector<2x8x16xf32>
    %18 = arith.addf %14, %17 : vector<2x8x16xf32>
    %19 = tpu.iota {dimensions = array<i32: 0>} : vector<32x16x16xi32>
    %20 = tpu.iota {dimensions = array<i32: 1>} : vector<32x16x16xi32>
    %21 = tpu.iota {dimensions = array<i32: 2>} : vector<32x16x16xi32>
    %c16_i32 = arith.constant 16 : i32
    %22 = vector.broadcast %c16_i32 : i32 to vector<32x16x16xi32>
    %23 = arith.cmpi slt, %19, %22 : vector<32x16x16xi32>
    %24 = arith.cmpi eq, %19, %20 : vector<32x16x16xi32>
    %25 = arith.andi %23, %24 : vector<32x16x16xi1>
    %c16_i32_10 = arith.constant 16 : i32
    %26 = vector.broadcast %c16_i32_10 : i32 to vector<32x16x16xi32>
    %27 = arith.cmpi sge, %19, %26 : vector<32x16x16xi32>
    %c16_i32_11 = arith.constant 16 : i32
    %28 = vector.broadcast %c16_i32_11 : i32 to vector<32x16x16xi32>
    %29 = arith.subi %19, %28 : vector<32x16x16xi32>
    %30 = arith.cmpi eq, %29, %21 : vector<32x16x16xi32>
    %31 = arith.andi %27, %30 : vector<32x16x16xi1>
    %32 = arith.ori %25, %31 : vector<32x16x16xi1>
    %33 = arith.extui %32 : vector<32x16x16xi1> to vector<32x16x16xi32>
    %34 = arith.sitofp %33 : vector<32x16x16xi32> to vector<32x16x16xf32>
    %35 = vector.shape_cast %34 : vector<32x16x16xf32> to vector<32x256xf32>
    %36 = tpu.concatenate %13, %18 in 2 : vector<2x8x16xf32>, vector<2x8x16xf32> -> vector<2x8x32xf32>
    %37 = vector.shape_cast %36 : vector<2x8x32xf32> to vector<16x32xf32>
    %cst_12 = arith.constant dense<0.000000e+00> : vector<16x256xf32>
    %38 = tpu.matmul %37, %35, %cst_12 {dimension_numbers = #tpu.dot_dimension_numbers<[1], [0], [0], [1], [0, 0, 1, 1], [], []>} : vector<16x32xf32>, vector<32x256xf32>, vector<16x256xf32> -> vector<16x256xf32>
    %39 = vector.shape_cast %38 : vector<16x256xf32> to vector<2x8x256xf32>
    %c0_13 = arith.constant 0 : index
    %c0_14 = arith.constant 0 : index
    %c0_15 = arith.constant 0 : index
    %40 = vector.load %arg5[%c0_13, %c0_14, %c0_15] : memref<2x8x256xf32, #tpu.memory_space<vmem>>, vector<2x8x256xf32>
    tpu.vector_store %arg5[%c0_13, %c0_14, %c0_15], %39 {strides = array<i32>} : memref<2x8x256xf32, #tpu.memory_space<vmem>>, vector<2x8x256xf32>,
    return
  }
  func.func @transform_0(%arg0: i32) -> (i32, i32, i32, i32) {
    %c0_i32 = arith.constant 0 : i32
    %c0_i32_0 = arith.constant 0 : i32
    %c0_i32_1 = arith.constant 0 : i32
    %c0_i32_2 = arith.constant 0 : i32
    return %arg0, %c0_i32, %c0_i32_0, %c0_i32_1 : i32, i32, i32, i32
  }
  func.func @transform_1(%arg0: i32) -> (i32, i32) {
    %c0_i32 = arith.constant 0 : i32
    %c0_i32_0 = arith.constant 0 : i32
    %c0_i32_1 = arith.constant 0 : i32
    return %c0_i32, %c0_i32_0 : i32, i32
  }
  func.func @transform_2(%arg0: i32) -> (i32, i32) {
    %c0_i32 = arith.constant 0 : i32
    %c0_i32_0 = arith.constant 0 : i32
    %c0_i32_1 = arith.constant 0 : i32
    return %c0_i32, %c0_i32_0 : i32, i32
  }
  func.func @transform_3(%arg0: i32) -> (i32, i32) {
    %c0_i32 = arith.constant 0 : i32
    %c0_i32_0 = arith.constant 0 : i32
    %c0_i32_1 = arith.constant 0 : i32
    return %c0_i32, %c0_i32_0 : i32, i32
  }
  func.func @transform_4(%arg0: i32) -> (i32, i32, i32) {
    %c0_i32 = arith.constant 0 : i32
    %c0_i32_0 = arith.constant 0 : i32
    %c0_i32_1 = arith.constant 0 : i32
    return %arg0, %c0_i32, %c0_i32_0 : i32, i32, i32
  }
}

</mosaic_0001>

<llo_original>
// kernel: tpu_custom_call.1
$region0: #{tpu_custom_call.1}
  #allocation0 [shape = 'u32[]', space=smem, size = 0x4, offset = 0x4, fixed_abs, tag = 'smem constant byte address 0x4 - core index']
  #allocation1 [shape = 'u32[144,128]{1,0:T(1,128)}', space=vmem, size = 0x12000, scoped, tag = 'internal scratch']
  %s0 = inlined_call_operand.hbm [shape: f32[2,4,16,16], index: 0, kind: input, shape index: {}]
  %s1 = inlined_call_operand.vmem [shape: f32[8,64], index: 1, kind: input, shape index: {}]
  %s2 = inlined_call_operand.vmem [shape: f32[8,64], index: 2, kind: input, shape index: {}]
  %s3 = inlined_call_operand.vmem [shape: f32[8,1], index: 3, kind: input, shape index: {}]
  %s4 = inlined_call_operand.hbm [shape: f32[2,8,256], index: 4, kind: output, shape index: {}]
  %s5 = sld [smem:[#allocation0]]
  $region30: #{tpu_custom_call.1} parent=0
    _
  %s7 = ssub.s32 1, %s5
  %s8 = scalar_select 0, %s7, %s5
  $region1: #{tpu_custom_call.1} parent=0
    #allocation2 [shape = 'u8[65536]{0}', space=vmem, size = 0x10000, scoped, tag = 'input window, operand 0, single buffered']
    #allocation3 [shape = 's32[1]{0}', space=sflag, size = 0x4, scoped, tag = 'scoped memory for tpu_custom_call.1']
    #allocation4 [shape = 's32[1]{0}', space=sflag, size = 0x4, scoped, tag = 'scoped memory for tpu_custom_call.1']
    #allocation5 [shape = 'u8[16384]{0}', space=vmem, size = 0x4000, scoped, tag = 'output window, operand 0, single buffered']
    %9 = vsyncpa [#allocation3], 0
    %10 = vsyncpa [#allocation4], 0
    // Predicated region
    $region2: #{tpu_custom_call.1} parent=1 // pred_check
      _
    $region3: #{tpu_custom_call.1} parent=1 // pred_check_branch
      %12 = sbr.rel (0) target = $region5
    $region4: #{tpu_custom_call.1} parent=1 // pred_region
      %s14 = ssub.s32 2048, 2048
      %15 = vsyncadd [#allocation3], %s14
      %s16 = sshll.u32 [#allocation2], 4
      %s17 = int_to_ptr.vmem [resolvable:$true] %s16
      %22 = dma.hbm_to_vmem [thread:$0]  %s0, 2048, %s17, [#allocation3], 128, 128, 8
    $region5: #{tpu_custom_call.1} parent=1 // pred_fallthru
      _
    // Predicated region
    $region6: #{tpu_custom_call.1} parent=1 // pred_check
      _
    $region7: #{tpu_custom_call.1} parent=1 // pred_check_branch
      %24 = sbr.rel (0) target = $region9
    $region8: #{tpu_custom_call.1} parent=1 // pred_region
      _
    $region9: #{tpu_custom_call.1} parent=1 // pred_fallthru
      _
    // Predicated region
    $region10: #{tpu_custom_call.1} parent=1 // pred_check
      _
    $region11: #{tpu_custom_call.1} parent=1 // pred_check_branch
      %26 = sbr.rel (0) target = $region13
    $region12: #{tpu_custom_call.1} parent=1 // pred_region
      _
    $region13: #{tpu_custom_call.1} parent=1 // pred_fallthru
      _
    // Predicated region
    $region14: #{tpu_custom_call.1} parent=1 // pred_check
      _
    $region15: #{tpu_custom_call.1} parent=1 // pred_check_branch
      %28 = sbr.rel (0) target = $region17
    $region16: #{tpu_custom_call.1} parent=1 // pred_region
      _
    $region17: #{tpu_custom_call.1} parent=1 // pred_fallthru
      _
    // Predicated region
    $region18: #{tpu_custom_call.1} parent=1 // pred_check
      _
    $region19: #{tpu_custom_call.1} parent=1 // pred_check_branch
      %30 = sbr.rel (0) target = $region21
    $region20: #{tpu_custom_call.1} parent=1 // pred_region
      %31 = dma.done [#allocation3], 2048
    $region21: #{tpu_custom_call.1} parent=1 // pred_fallthru
      _
    %v32 = vld [vmem:[#allocation2] sm:$0xff]
    %v33 = vld [vmem:[#allocation2 + $0x8] sm:$0xff]
    %v34 = vld [vmem:[#allocation2 + $0x10] sm:$0xff]
    %v35 = vld [vmem:[#allocation2 + $0x18] sm:$0xff]
    %v36 = vld [vmem:[#allocation2 + $0x20] sm:$0xff]
    %v37 = vld [vmem:[#allocation2 + $0x28] sm:$0xff]
    %v38 = vld [vmem:[#allocation2 + $0x30] sm:$0xff]
    %v39 = vld [vmem:[#allocation2 + $0x38] sm:$0xff]
    %v40 = vld [vmem:[#allocation2 + $0x40] sm:$0xff]
    %v41 = vld [vmem:[#allocation2 + $0x48] sm:$0xff]
    %v42 = vld [vmem:[#allocation2 + $0x50] sm:$0xff]
    %v43 = vld [vmem:[#allocation2 + $0x58] sm:$0xff]
    %v44 = vld [vmem:[#allocation2 + $0x60] sm:$0xff]
    %v45 = vld [vmem:[#allocation2 + $0x68] sm:$0xff]
    %v46 = vld [vmem:[#allocation2 + $0x70] sm:$0xff]
    %v47 = vld [vmem:[#allocation2 + $0x78] sm:$0xff]
    %48 = vxpose.xlu0.b32.start [1/16] %v32, 128
    %49 = vxpose.xlu0.b32.cont [2/16] %v33, 128
    %50 = vxpose.xlu0.b32.cont [3/16] 0.0, 128
    %51 = vxpose.xlu0.b32.cont [4/16] 0.0, 128
    %52 = vxpose.xlu0.b32.cont [5/16] 0.0, 128
    %53 = vxpose.xlu0.b32.cont [6/16] 0.0, 128
    %54 = vxpose.xlu0.b32.cont [7/16] 0.0, 128
    %55 = vxpose.xlu0.b32.cont [8/16] 0.0, 128
    %56 = vxpose.xlu0.b32.cont [9/16] 0.0, 128
    %57 = vxpose.xlu0.b32.cont [10/16] 0.0, 128
    %58 = vxpose.xlu0.b32.cont [11/16] 0.0, 128
    %59 = vxpose.xlu0.b32.cont [12/16] 0.0, 128
    %60 = vxpose.xlu0.b32.cont [13/16] 0.0, 128
    %61 = vxpose.xlu0.b32.cont [14/16] 0.0, 128
    %62 = vxpose.xlu0.b32.cont [15/16] 0.0, 128
    %63 = vxpose.xlu0.b32.end [16/16] 0.0, 128
    %v64 = vpop.trf.xlu0
    %v65 = vpop.trf.xlu0
    %v66 = vpop.trf.xlu0
    %v67 = vpop.trf.xlu0
    %v68 = vpop.trf.xlu0
    %v69 = vpop.trf.xlu0
    %v70 = vpop.trf.xlu0
    %v71 = vpop.trf.xlu0
    %v72 = vpop.trf.xlu0
    %v73 = vpop.trf.xlu0
    %v74 = vpop.trf.xlu0
    %v75 = vpop.trf.xlu0
    %v76 = vpop.trf.xlu0
    %v77 = vpop.trf.xlu0
    %v78 = vpop.trf.xlu0
    %v79 = vpop.trf.xlu0
    %80 = vxpose.xlu0.b32.start [1/16] %v34, 128
    %81 = vxpose.xlu0.b32.cont [2/16] %v35, 128
    %82 = vxpose.xlu0.b32.cont [3/16] 0.0, 128
    %83 = vxpose.xlu0.b32.cont [4/16] 0.0, 128
    %84 = vxpose.xlu0.b32.cont [5/16] 0.0, 128
    %85 = vxpose.xlu0.b32.cont [6/16] 0.0, 128
    %86 = vxpose.xlu0.b32.cont [7/16] 0.0, 128
    %87 = vxpose.xlu0.b32.cont [8/16] 0.0, 128
    %88 = vxpose.xlu0.b32.cont [9/16] 0.0, 128
    %89 = vxpose.xlu0.b32.cont [10/16] 0.0, 128
    %90 = vxpose.xlu0.b32.cont [11/16] 0.0, 128
    %91 = vxpose.xlu0.b32.cont [12/16] 0.0, 128
    %92 = vxpose.xlu0.b32.cont [13/16] 0.0, 128
    %93 = vxpose.xlu0.b32.cont [14/16] 0.0, 128
    %94 = vxpose.xlu0.b32.cont [15/16] 0.0, 128
    %95 = vxpose.xlu0.b32.end [16/16] 0.0, 128
    %v96 = vpop.trf.xlu0
    %v97 = vpop.trf.xlu0
    %v98 = vpop.trf.xlu0
    %v99 = vpop.trf.xlu0
    %v100 = vpop.trf.xlu0
    %v101 = vpop.trf.xlu0
    %v102 = vpop.trf.xlu0
    %v103 = vpop.trf.xlu0
    %v104 = vpop.trf.xlu0
    %v105 = vpop.trf.xlu0
    %v106 = vpop.trf.xlu0
    %v107 = vpop.trf.xlu0
    %v108 = vpop.trf.xlu0
    %v109 = vpop.trf.xlu0
    %v110 = vpop.trf.xlu0
    %v111 = vpop.trf.xlu0
    %112 = vxpose.xlu0.b32.start [1/16] %v36, 128
    %113 = vxpose.xlu0.b32.cont [2/16] %v37, 128
    %114 = vxpose.xlu0.b32.cont [3/16] 0.0, 128
    %115 = vxpose.xlu0.b32.cont [4/16] 0.0, 128
    %116 = vxpose.xlu0.b32.cont [5/16] 0.0, 128
    %117 = vxpose.xlu0.b32.cont [6/16] 0.0, 128
    %118 = vxpose.xlu0.b32.cont [7/16] 0.0, 128
    %119 = vxpose.xlu0.b32.cont [8/16] 0.0, 128
    %120 = vxpose.xlu0.b32.cont [9/16] 0.0, 128
    %121 = vxpose.xlu0.b32.cont [10/16] 0.0, 128
    %122 = vxpose.xlu0.b32.cont [11/16] 0.0, 128
    %123 = vxpose.xlu0.b32.cont [12/16] 0.0, 128
    %124 = vxpose.xlu0.b32.cont [13/16] 0.0, 128
    %125 = vxpose.xlu0.b32.cont [14/16] 0.0, 128
    %126 = vxpose.xlu0.b32.cont [15/16] 0.0, 128
    %127 = vxpose.xlu0.b32.end [16/16] 0.0, 128
    %v128 = vpop.trf.xlu0
    %v129 = vpop.trf.xlu0
    %v130 = vpop.trf.xlu0
    %v131 = vpop.trf.xlu0
    %v132 = vpop.trf.xlu0
    %v133 = vpop.trf.xlu0
    %v134 = vpop.trf.xlu0
    %v135 = vpop.trf.xlu0
    %v136 = vpop.trf.xlu0
    %v137 = vpop.trf.xlu0
    %v138 = vpop.trf.xlu0
    %v139 = vpop.trf.xlu0
    %v140 = vpop.trf.xlu0
    %v141 = vpop.trf.xlu0
    %v142 = vpop.trf.xlu0
    %v143 = vpop.trf.xlu0
    %144 = vxpose.xlu0.b32.start [1/16] %v38, 128
    %145 = vxpose.xlu0.b32.cont [2/16] %v39, 128
    %146 = vxpose.xlu0.b32.cont [3/16] 0.0, 128
    %147 = vxpose.xlu0.b32.cont [4/16] 0.0, 128
    %148 = vxpose.xlu0.b32.cont [5/16] 0.0, 128
    %149 = vxpose.xlu0.b32.cont [6/16] 0.0, 128
    %150 = vxpose.xlu0.b32.cont [7/16] 0.0, 128
    %151 = vxpose.xlu0.b32.cont [8/16] 0.0, 128
    %152 = vxpose.xlu0.b32.cont [9/16] 0.0, 128
    %153 = vxpose.xlu0.b32.cont [10/16] 0.0, 128
    %154 = vxpose.xlu0.b32.cont [11/16] 0.0, 128
    %155 = vxpose.xlu0.b32.cont [12/16] 0.0, 128
    %156 = vxpose.xlu0.b32.cont [13/16] 0.0, 128
    %157 = vxpose.xlu0.b32.cont [14/16] 0.0, 128
    %158 = vxpose.xlu0.b32.cont [15/16] 0.0, 128
    %159 = vxpose.xlu0.b32.end [16/16] 0.0, 128
    %v160 = vpop.trf.xlu0
    %v161 = vpop.trf.xlu0
    %v162 = vpop.trf.xlu0
    %v163 = vpop.trf.xlu0
    %v164 = vpop.trf.xlu0
    %v165 = vpop.trf.xlu0
    %v166 = vpop.trf.xlu0
    %v167 = vpop.trf.xlu0
    %v168 = vpop.trf.xlu0
    %v169 = vpop.trf.xlu0
    %v170 = vpop.trf.xlu0
    %v171 = vpop.trf.xlu0
    %v172 = vpop.trf.xlu0
    %v173 = vpop.trf.xlu0
    %v174 = vpop.trf.xlu0
    %v175 = vpop.trf.xlu0
    %176 = vxpose.xlu0.b32.start [1/16] %v40, 128
    %177 = vxpose.xlu0.b32.cont [2/16] %v41, 128
    %178 = vxpose.xlu0.b32.cont [3/16] 0.0, 128
    %179 = vxpose.xlu0.b32.cont [4/16] 0.0, 128
    %180 = vxpose.xlu0.b32.cont [5/16] 0.0, 128
    %181 = vxpose.xlu0.b32.cont [6/16] 0.0, 128
    %182 = vxpose.xlu0.b32.cont [7/16] 0.0, 128
    %183 = vxpose.xlu0.b32.cont [8/16] 0.0, 128
    %184 = vxpose.xlu0.b32.cont [9/16] 0.0, 128
    %185 = vxpose.xlu0.b32.cont [10/16] 0.0, 128
    %186 = vxpose.xlu0.b32.cont [11/16] 0.0, 128
    %187 = vxpose.xlu0.b32.cont [12/16] 0.0, 128
    %188 = vxpose.xlu0.b32.cont [13/16] 0.0, 128
    %189 = vxpose.xlu0.b32.cont [14/16] 0.0, 128
    %190 = vxpose.xlu0.b32.cont [15/16] 0.0, 128
    %191 = vxpose.xlu0.b32.end [16/16] 0.0, 128
    %v192 = vpop.trf.xlu0
    %v193 = vpop.trf.xlu0
    %v194 = vpop.trf.xlu0
    %v195 = vpop.trf.xlu0
    %v196 = vpop.trf.xlu0
    %v197 = vpop.trf.xlu0
    %v198 = vpop.trf.xlu0
    %v199 = vpop.trf.xlu0
    %v200 = vpop.trf.xlu0
    %v201 = vpop.trf.xlu0
    %v202 = vpop.trf.xlu0
    %v203 = vpop.trf.xlu0
    %v204 = vpop.trf.xlu0
    %v205 = vpop.trf.xlu0
    %v206 = vpop.trf.xlu0
    %v207 = vpop.trf.xlu0
    %208 = vxpose.xlu0.b32.start [1/16] %v42, 128
    %209 = vxpose.xlu0.b32.cont [2/16] %v43, 128
    %210 = vxpose.xlu0.b32.cont [3/16] 0.0, 128
    %211 = vxpose.xlu0.b32.cont [4/16] 0.0, 128
    %212 = vxpose.xlu0.b32.cont [5/16] 0.0, 128
    %213 = vxpose.xlu0.b32.cont [6/16] 0.0, 128
    %214 = vxpose.xlu0.b32.cont [7/16] 0.0, 128
    %215 = vxpose.xlu0.b32.cont [8/16] 0.0, 128
    %216 = vxpose.xlu0.b32.cont [9/16] 0.0, 128
    %217 = vxpose.xlu0.b32.cont [10/16] 0.0, 128
    %218 = vxpose.xlu0.b32.cont [11/16] 0.0, 128
    %219 = vxpose.xlu0.b32.cont [12/16] 0.0, 128
    %220 = vxpose.xlu0.b32.cont [13/16] 0.0, 128
    %221 = vxpose.xlu0.b32.cont [14/16] 0.0, 128
    %222 = vxpose.xlu0.b32.cont [15/16] 0.0, 128
    %223 = vxpose.xlu0.b32.end [16/16] 0.0, 128
    %v224 = vpop.trf.xlu0
    %v225 = vpop.trf.xlu0
    %v226 = vpop.trf.xlu0
    %v227 = vpop.trf.xlu0
    %v228 = vpop.trf.xlu0
    %v229 = vpop.trf.xlu0
    %v230 = vpop.trf.xlu0
    %v231 = vpop.trf.xlu0
    %v232 = vpop.trf.xlu0
    %v233 = vpop.trf.xlu0
    %v234 = vpop.trf.xlu0
    %v235 = vpop.trf.xlu0
    %v236 = vpop.trf.xlu0
    %v237 = vpop.trf.xlu0
    %v238 = vpop.trf.xlu0
    %v239 = vpop.trf.xlu0
    %240 = vxpose.xlu0.b32.start [1/16] %v44, 128
    %241 = vxpose.xlu0.b32.cont [2/16] %v45, 128
    %242 = vxpose.xlu0.b32.cont [3/16] 0.0, 128
    %243 = vxpose.xlu0.b32.cont [4/16] 0.0, 128
    %244 = vxpose.xlu0.b32.cont [5/16] 0.0, 128
    %245 = vxpose.xlu0.b32.cont [6/16] 0.0, 128
    %246 = vxpose.xlu0.b32.cont [7/16] 0.0, 128
    %247 = vxpose.xlu0.b32.cont [8/16] 0.0, 128
    %248 = vxpose.xlu0.b32.cont [9/16] 0.0, 128
    %249 = vxpose.xlu0.b32.cont [10/16] 0.0, 128
    %250 = vxpose.xlu0.b32.cont [11/16] 0.0, 128
    %251 = vxpose.xlu0.b32.cont [12/16] 0.0, 128
    %252 = vxpose.xlu0.b32.cont [13/16] 0.0, 128
    %253 = vxpose.xlu0.b32.cont [14/16] 0.0, 128
    %254 = vxpose.xlu0.b32.cont [15/16] 0.0, 128
    %255 = vxpose.xlu0.b32.end [16/16] 0.0, 128
    %v256 = vpop.trf.xlu0
    %v257 = vpop.trf.xlu0
    %v258 = vpop.trf.xlu0
    %v259 = vpop.trf.xlu0
    %v260 = vpop.trf.xlu0
    %v261 = vpop.trf.xlu0
    %v262 = vpop.trf.xlu0
    %v263 = vpop.trf.xlu0
    %v264 = vpop.trf.xlu0
    %v265 = vpop.trf.xlu0
    %v266 = vpop.trf.xlu0
    %v267 = vpop.trf.xlu0
    %v268 = vpop.trf.xlu0
    %v269 = vpop.trf.xlu0
    %v270 = vpop.trf.xlu0
    %v271 = vpop.trf.xlu0
    %272 = vxpose.xlu0.b32.start [1/16] %v46, 128
    %273 = vxpose.xlu0.b32.cont [2/16] %v47, 128
    %274 = vxpose.xlu0.b32.cont [3/16] 0.0, 128
    %275 = vxpose.xlu0.b32.cont [4/16] 0.0, 128
    %276 = vxpose.xlu0.b32.cont [5/16] 0.0, 128
    %277 = vxpose.xlu0.b32.cont [6/16] 0.0, 128
    %278 = vxpose.xlu0.b32.cont [7/16] 0.0, 128
    %279 = vxpose.xlu0.b32.cont [8/16] 0.0, 128
    %280 = vxpose.xlu0.b32.cont [9/16] 0.0, 128
    %281 = vxpose.xlu0.b32.cont [10/16] 0.0, 128
    %282 = vxpose.xlu0.b32.cont [11/16] 0.0, 128
    %283 = vxpose.xlu0.b32.cont [12/16] 0.0, 128
    %284 = vxpose.xlu0.b32.cont [13/16] 0.0, 128
    %285 = vxpose.xlu0.b32.cont [14/16] 0.0, 128
    %286 = vxpose.xlu0.b32.cont [15/16] 0.0, 128
    %287 = vxpose.xlu0.b32.end [16/16] 0.0, 128
    %v288 = vpop.trf.xlu0
    %v289 = vpop.trf.xlu0
    %v290 = vpop.trf.xlu0
    %v291 = vpop.trf.xlu0
    %v292 = vpop.trf.xlu0
    %v293 = vpop.trf.xlu0
    %v294 = vpop.trf.xlu0
    %v295 = vpop.trf.xlu0
    %v296 = vpop.trf.xlu0
    %v297 = vpop.trf.xlu0
    %v298 = vpop.trf.xlu0
    %v299 = vpop.trf.xlu0
    %v300 = vpop.trf.xlu0
    %v301 = vpop.trf.xlu0
    %v302 = vpop.trf.xlu0
    %v303 = vpop.trf.xlu0
    %v304 = vld [vmem:[%s1] sm:$0xff]
    %v305 = vld [vmem:[%s2] sm:$0xff]
    %vm306 = vcmask 523264
    %v308 = vsel %vm306, %v304, 0
    %310 = vmatprep.subr.mxu0 0.0
    %311 = vmatpush1.msra.mxu0 %v64
    %312 = vmatprep.subr.mxu0 0.0
    %313 = vmatpush1.msra.mxu0 %v65
    %314 = vmatprep.subr.mxu0 0.0
    %315 = vmatpush1.msra.mxu0 %v96
    %316 = vmatprep.subr.mxu0 0.0
    %317 = vmatpush1.msra.mxu0 %v97
    %318 = vmatprep.subr.mxu0 0.0
    %319 = vmatpush1.msra.mxu0 %v128
    %320 = vmatprep.subr.mxu0 0.0
    %321 = vmatpush1.msra.mxu0 %v129
    %322 = vmatprep.subr.mxu0 0.0
    %323 = vmatpush1.msra.mxu0 %v160
    %324 = vmatprep.subr.mxu0 0.0
    %325 = vmatpush1.msra.mxu0 %v161
    %326 = vmatprep.subr.mxu0 0.0
    %327 = vmatpush1.msra.mxu0 0.0
    %328 = vmatprep.subr.mxu0 0.0
    %329 = vmatpush1.msra.mxu0 0.0
    %330 = vmatprep.subr.mxu0 0.0
    %331 = vmatpush1.msra.mxu0 0.0
    %332 = vmatprep.subr.mxu0 0.0
    %333 = vmatpush1.msra.mxu0 0.0
    %334 = vmatprep.subr.mxu0 0.0
    %335 = vmatpush1.msra.mxu0 0.0
    %336 = vmatprep.subr.mxu0 0.0
    %337 = vmatpush1.msra.mxu0 0.0
    %338 = vmatprep.subr.mxu0 0.0
    %339 = vmatpush1.msra.mxu0 0.0
    %340 = vmatprep.subr.mxu0 0.0
    %341 = vmatpush1.msra.mxu0 0.0
    %342 = vmatprep.subr.mxu0 0.0
    %343 = vmatpush1.msra.mxu0 0.0
    %344 = vmatprep.subr.mxu0 0.0
    %345 = vmatpush1.msra.mxu0 0.0
    %346 = vmatprep.subr.mxu0 0.0
    %347 = vmatpush1.msra.mxu0 0.0
    %348 = vmatprep.subr.mxu0 0.0
    %349 = vmatpush1.msra.mxu0 0.0
    %350 = vmatprep.subr.mxu0 0.0
    %351 = vmatpush1.msra.mxu0 0.0
    %352 = vmatprep.subr.mxu0 0.0
    %353 = vmatpush1.msra.mxu0 0.0
    %354 = vmatprep.subr.mxu0 0.0
    %355 = vmatpush1.msra.mxu0 0.0
    %356 = vmatprep.subr.mxu0 0.0
    %357 = vmatpush1.msra.mxu0 0.0
    %358 = vmatprep.subr.mxu0 0.0
    %359 = vmatpush1.msra.mxu0 0.0
    %360 = vmatprep.subr.mxu0 0.0
    %361 = vmatpush1.msra.mxu0 0.0
    %362 = vmatprep.subr.mxu0 0.0
    %363 = vmatpush1.msra.mxu0 0.0
    %364 = vmatprep.subr.mxu0 0.0
    %365 = vmatpush1.msra.mxu0 0.0
    %366 = vmatprep.subr.mxu0 0.0
    %367 = vmatpush1.msra.mxu0 0.0
    %368 = vmatprep.subr.mxu0 0.0
    %369 = vmatpush1.msra.mxu0 0.0
    %370 = vmatprep.subr.mxu0 0.0
    %371 = vmatpush1.msra.mxu0 0.0
    %372 = vmatprep.subr.mxu0 0.0
    %373 = vmatpush1.msra.mxu0 0.0
    %374 = vmatprep.mubr.f32.mxu0 0.0
    %375 = vmatmul.mubr.f32.gmra.mrb[0].mxu0 %v308
    %v376 = vpop.f32.mrb[0].mxu0
    %v377 = vadd.f32 0.0, %v376
    %v378 = vpop.f32.mrb[0].mxu0
    %379 = vdwg.mxu0
    %380 = vmatprep.subr.mxu0 0.0
    %381 = vmatpush1.msra.mxu0 %v192
    %382 = vmatprep.subr.mxu0 0.0
    %383 = vmatpush1.msra.mxu0 %v193
    %384 = vmatprep.subr.mxu0 0.0
    %385 = vmatpush1.msra.mxu0 %v224
    %386 = vmatprep.subr.mxu0 0.0
    %387 = vmatpush1.msra.mxu0 %v225
    %388 = vmatprep.subr.mxu0 0.0
    %389 = vmatpush1.msra.mxu0 %v256
    %390 = vmatprep.subr.mxu0 0.0
    %391 = vmatpush1.msra.mxu0 %v257
    %392 = vmatprep.subr.mxu0 0.0
    %393 = vmatpush1.msra.mxu0 %v288
    %394 = vmatprep.subr.mxu0 0.0
    %395 = vmatpush1.msra.mxu0 %v289
    %396 = vmatprep.subr.mxu0 0.0
    %397 = vmatpush1.msra.mxu0 0.0
    %398 = vmatprep.subr.mxu0 0.0
    %399 = vmatpush1.msra.mxu0 0.0
    %400 = vmatprep.subr.mxu0 0.0
    %401 = vmatpush1.msra.mxu0 0.0
    %402 = vmatprep.subr.mxu0 0.0
    %403 = vmatpush1.msra.mxu0 0.0
    %404 = vmatprep.subr.mxu0 0.0
    %405 = vmatpush1.msra.mxu0 0.0
    %406 = vmatprep.subr.mxu0 0.0
    %407 = vmatpush1.msra.mxu0 0.0
    %408 = vmatprep.subr.mxu0 0.0
    %409 = vmatpush1.msra.mxu0 0.0
    %410 = vmatprep.subr.mxu0 0.0
    %411 = vmatpush1.msra.mxu0 0.0
    %412 = vmatprep.subr.mxu0 0.0
    %413 = vmatpush1.msra.mxu0 0.0
    %414 = vmatprep.subr.mxu0 0.0
    %415 = vmatpush1.msra.mxu0 0.0
    %416 = vmatprep.subr.mxu0 0.0
    %417 = vmatpush1.msra.mxu0 0.0
    %418 = vmatprep.subr.mxu0 0.0
    %419 = vmatpush1.msra.mxu0 0.0
    %420 = vmatprep.subr.mxu0 0.0
    %421 = vmatpush1.msra.mxu0 0.0
    %422 = vmatprep.subr.mxu0 0.0
    %423 = vmatpush1.msra.mxu0 0.0
    %424 = vmatprep.subr.mxu0 0.0
    %425 = vmatpush1.msra.mxu0 0.0
    %426 = vmatprep.subr.mxu0 0.0
    %427 = vmatpush1.msra.mxu0 0.0
    %428 = vmatprep.subr.mxu0 0.0
    %429 = vmatpush1.msra.mxu0 0.0
    %430 = vmatprep.subr.mxu0 0.0
    %431 = vmatpush1.msra.mxu0 0.0
    %432 = vmatprep.subr.mxu0 0.0
    %433 = vmatpush1.msra.mxu0 0.0
    %434 = vmatprep.subr.mxu0 0.0
    %435 = vmatpush1.msra.mxu0 0.0
    %436 = vmatprep.subr.mxu0 0.0
    %437 = vmatpush1.msra.mxu0 0.0
    %438 = vmatprep.subr.mxu0 0.0
    %439 = vmatpush1.msra.mxu0 0.0
    %440 = vmatprep.subr.mxu0 0.0
    %441 = vmatpush1.msra.mxu0 0.0
    %442 = vmatprep.subr.mxu0 0.0
    %443 = vmatpush1.msra.mxu0 0.0
    %444 = vmatprep.mubr.f32.mxu0 0.0
    %445 = vmatmul.mubr.f32.gmra.mrb[0].mxu0 %v308
    %v446 = vpop.f32.mrb[0].mxu0
    %v447 = vadd.f32 0.0, %v446
    %v448 = vpop.f32.mrb[0].mxu0
    %449 = vdwg.mxu0
    %v450 = vld [vmem:[%s3] sm:$0xff]
    %452 = vset.pattern.permute.xlu0 0
    %453 = vperm.xlu0 %452, %v450
    %v454 = vpop.permute.xlu0 %453
    %v457 = vsel %vm306, %v305, 0
    %459 = vmatprep.subr.mxu0 0.0
    %460 = vmatpush1.msra.mxu0 %v32
    %461 = vmatprep.subr.mxu0 0.0
    %462 = vmatpush1.msra.mxu0 %v33
    %463 = vmatprep.subr.mxu0 0.0
    %464 = vmatpush1.msra.mxu0 %v34
    %465 = vmatprep.subr.mxu0 0.0
    %466 = vmatpush1.msra.mxu0 %v35
    %467 = vmatprep.subr.mxu0 0.0
    %468 = vmatpush1.msra.mxu0 %v36
    %469 = vmatprep.subr.mxu0 0.0
    %470 = vmatpush1.msra.mxu0 %v37
    %471 = vmatprep.subr.mxu0 0.0
    %472 = vmatpush1.msra.mxu0 %v38
    %473 = vmatprep.subr.mxu0 0.0
    %474 = vmatpush1.msra.mxu0 %v39
    %475 = vmatprep.subr.mxu0 0.0
    %476 = vmatpush1.msra.mxu0 0.0
    %477 = vmatprep.subr.mxu0 0.0
    %478 = vmatpush1.msra.mxu0 0.0
    %479 = vmatprep.subr.mxu0 0.0
    %480 = vmatpush1.msra.mxu0 0.0
    %481 = vmatprep.subr.mxu0 0.0
    %482 = vmatpush1.msra.mxu0 0.0
    %483 = vmatprep.subr.mxu0 0.0
    %484 = vmatpush1.msra.mxu0 0.0
    %485 = vmatprep.subr.mxu0 0.0
    %486 = vmatpush1.msra.mxu0 0.0
    %487 = vmatprep.subr.mxu0 0.0
    %488 = vmatpush1.msra.mxu0 0.0
    %489 = vmatprep.subr.mxu0 0.0
    %490 = vmatpush1.msra.mxu0 0.0
    %491 = vmatprep.subr.mxu0 0.0
    %492 = vmatpush1.msra.mxu0 0.0
    %493 = vmatprep.subr.mxu0 0.0
    %494 = vmatpush1.msra.mxu0 0.0
    %495 = vmatprep.subr.mxu0 0.0
    %496 = vmatpush1.msra.mxu0 0.0
    %497 = vmatprep.subr.mxu0 0.0
    %498 = vmatpush1.msra.mxu0 0.0
    %499 = vmatprep.subr.mxu0 0.0
    %500 = vmatpush1.msra.mxu0 0.0
    %501 = vmatprep.subr.mxu0 0.0
    %502 = vmatpush1.msra.mxu0 0.0
    %503 = vmatprep.subr.mxu0 0.0
    %504 = vmatpush1.msra.mxu0 0.0
    %505 = vmatprep.subr.mxu0 0.0
    %506 = vmatpush1.msra.mxu0 0.0
    %507 = vmatprep.subr.mxu0 0.0
    %508 = vmatpush1.msra.mxu0 0.0
    %509 = vmatprep.subr.mxu0 0.0
    %510 = vmatpush1.msra.mxu0 0.0
    %511 = vmatprep.subr.mxu0 0.0
    %512 = vmatpush1.msra.mxu0 0.0
    %513 = vmatprep.subr.mxu0 0.0
    %514 = vmatpush1.msra.mxu0 0.0
    %515 = vmatprep.subr.mxu0 0.0
    %516 = vmatpush1.msra.mxu0 0.0
    %517 = vmatprep.subr.mxu0 0.0
    %518 = vmatpush1.msra.mxu0 0.0
    %519 = vmatprep.subr.mxu0 0.0
    %520 = vmatpush1.msra.mxu0 0.0
    %521 = vmatprep.subr.mxu0 0.0
    %522 = vmatpush1.msra.mxu0 0.0
    %523 = vmatprep.mubr.f32.mxu0 0.0
    %524 = vmatmul.mubr.f32.gmra.mrb[0].mxu0 %v457
    %v525 = vpop.f32.mrb[0].mxu0
    %v526 = vadd.f32 %v454, %v525
    %v527 = vpop.f32.mrb[0].mxu0
    %528 = vdwg.mxu0
    %529 = vmatprep.subr.mxu0 0.0
    %530 = vmatpush1.msra.mxu0 %v40
    %531 = vmatprep.subr.mxu0 0.0
    %532 = vmatpush1.msra.mxu0 %v41
    %533 = vmatprep.subr.mxu0 0.0
    %534 = vmatpush1.msra.mxu0 %v42
    %535 = vmatprep.subr.mxu0 0.0
    %536 = vmatpush1.msra.mxu0 %v43
    %537 = vmatprep.subr.mxu0 0.0
    %538 = vmatpush1.msra.mxu0 %v44
    %539 = vmatprep.subr.mxu0 0.0
    %540 = vmatpush1.msra.mxu0 %v45
    %541 = vmatprep.subr.mxu0 0.0
    %542 = vmatpush1.msra.mxu0 %v46
    %543 = vmatprep.subr.mxu0 0.0
    %544 = vmatpush1.msra.mxu0 %v47
    %545 = vmatprep.subr.mxu0 0.0
    %546 = vmatpush1.msra.mxu0 0.0
    %547 = vmatprep.subr.mxu0 0.0
    %548 = vmatpush1.msra.mxu0 0.0
    %549 = vmatprep.subr.mxu0 0.0
    %550 = vmatpush1.msra.mxu0 0.0
    %551 = vmatprep.subr.mxu0 0.0
    %552 = vmatpush1.msra.mxu0 0.0
    %553 = vmatprep.subr.mxu0 0.0
    %554 = vmatpush1.msra.mxu0 0.0
    %555 = vmatprep.subr.mxu0 0.0
    %556 = vmatpush1.msra.mxu0 0.0
    %557 = vmatprep.subr.mxu0 0.0
    %558 = vmatpush1.msra.mxu0 0.0
    %559 = vmatprep.subr.mxu0 0.0
    %560 = vmatpush1.msra.mxu0 0.0
    %561 = vmatprep.subr.mxu0 0.0
    %562 = vmatpush1.msra.mxu0 0.0
    %563 = vmatprep.subr.mxu0 0.0
    %564 = vmatpush1.msra.mxu0 0.0
    %565 = vmatprep.subr.mxu0 0.0
    %566 = vmatpush1.msra.mxu0 0.0
    %567 = vmatprep.subr.mxu0 0.0
    %568 = vmatpush1.msra.mxu0 0.0
    %569 = vmatprep.subr.mxu0 0.0
    %570 = vmatpush1.msra.mxu0 0.0
    %571 = vmatprep.subr.mxu0 0.0
    %572 = vmatpush1.msra.mxu0 0.0
    %573 = vmatprep.subr.mxu0 0.0
    %574 = vmatpush1.msra.mxu0 0.0
    %575 = vmatprep.subr.mxu0 0.0
    %576 = vmatpush1.msra.mxu0 0.0
    %577 = vmatprep.subr.mxu0 0.0
    %578 = vmatpush1.msra.mxu0 0.0
    %579 = vmatprep.subr.mxu0 0.0
    %580 = vmatpush1.msra.mxu0 0.0
    %581 = vmatprep.subr.mxu0 0.0
    %582 = vmatpush1.msra.mxu0 0.0
    %583 = vmatprep.subr.mxu0 0.0
    %584 = vmatpush1.msra.mxu0 0.0
    %585 = vmatprep.subr.mxu0 0.0
    %586 = vmatpush1.msra.mxu0 0.0
    %587 = vmatprep.subr.mxu0 0.0
    %588 = vmatpush1.msra.mxu0 0.0
    %589 = vmatprep.subr.mxu0 0.0
    %590 = vmatpush1.msra.mxu0 0.0
    %591 = vmatprep.subr.mxu0 0.0
    %592 = vmatpush1.msra.mxu0 0.0
    %593 = vmatprep.mubr.f32.mxu0 0.0
    %594 = vmatmul.mubr.f32.gmra.mrb[0].mxu0 %v457
    %v595 = vpop.f32.mrb[0].mxu0
    %v596 = vadd.f32 %v454, %v595
    %v597 = vpop.f32.mrb[0].mxu0
    %598 = vdwg.mxu0
    %v599 = vlaneseq
    %v600 = vshrl.u32 %v599, 7
    %v601 = vadd.s32 %v600, 8
    %v602 = vlaneseq
    %v603 = vand.u32 %v602, 127
    %vm604 = vcmp.eq.s32.totalorder %v600, 0
    %vm605 = vcmp.eq.s32.totalorder %v601, 0
    %vm606 = vcmp.eq.s32.totalorder %v600, 1
    %vm607 = vcmp.eq.s32.totalorder %v601, 1
    %vm608 = vcmp.eq.s32.totalorder %v600, 2
    %vm609 = vcmp.eq.s32.totalorder %v601, 2
    %vm610 = vcmp.eq.s32.totalorder %v600, 3
    %vm611 = vcmp.eq.s32.totalorder %v601, 3
    %vm612 = vcmp.eq.s32.totalorder %v600, 4
    %vm613 = vcmp.eq.s32.totalorder %v601, 4
    %vm614 = vcmp.eq.s32.totalorder %v600, 5
    %vm615 = vcmp.eq.s32.totalorder %v601, 5
    %vm616 = vcmp.eq.s32.totalorder %v600, 6
    %vm617 = vcmp.eq.s32.totalorder %v601, 6
    %vm618 = vcmp.eq.s32.totalorder %v600, 7
    %vm619 = vcmp.eq.s32.totalorder %v601, 7
    %vm620 = vcmp.eq.s32.totalorder %v600, 8
    %vm621 = vcmp.eq.s32.totalorder %v601, 8
    %vm622 = vcmp.eq.s32.totalorder %v600, 9
    %vm623 = vcmp.eq.s32.totalorder %v601, 9
    %vm624 = vcmp.eq.s32.totalorder %v600, 10
    %vm625 = vcmp.eq.s32.totalorder %v601, 10
    %vm626 = vcmp.eq.s32.totalorder %v600, 11
    %vm627 = vcmp.eq.s32.totalorder %v601, 11
    %vm628 = vcmp.eq.s32.totalorder %v600, 12
    %vm629 = vcmp.eq.s32.totalorder %v601, 12
    %vm630 = vcmp.eq.s32.totalorder %v600, 13
    %vm631 = vcmp.eq.s32.totalorder %v601, 13
    %vm632 = vcmp.eq.s32.totalorder %v600, 14
    %vm633 = vcmp.eq.s32.totalorder %v601, 14
    %vm634 = vcmp.eq.s32.totalorder %v600, 15
    %vm635 = vcmp.eq.s32.totalorder %v601, 15
    %vm636 = vcmp.eq.s32.totalorder %v600, 16
    %vm637 = vcmp.eq.s32.totalorder %v601, 16
    %vm638 = vcmp.eq.s32.totalorder %v600, 17
    %vm639 = vcmp.eq.s32.totalorder %v601, 17
    %vm640 = vcmp.eq.s32.totalorder %v600, 18
    %vm641 = vcmp.eq.s32.totalorder %v601, 18
    %vm642 = vcmp.eq.s32.totalorder %v600, 19
    %vm643 = vcmp.eq.s32.totalorder %v601, 19
    %vm644 = vcmp.eq.s32.totalorder %v600, 20
    %vm645 = vcmp.eq.s32.totalorder %v601, 20
    %vm646 = vcmp.eq.s32.totalorder %v600, 21
    %vm647 = vcmp.eq.s32.totalorder %v601, 21
    %vm648 = vcmp.eq.s32.totalorder %v600, 22
    %vm649 = vcmp.eq.s32.totalorder %v601, 22
    %vm650 = vcmp.eq.s32.totalorder %v600, 23
    %vm651 = vcmp.eq.s32.totalorder %v601, 23
    %vm652 = vcmp.eq.s32.totalorder %v600, 24
    %vm653 = vcmp.eq.s32.totalorder %v601, 24
    %vm654 = vcmp.eq.s32.totalorder %v600, 25
    %vm655 = vcmp.eq.s32.totalorder %v601, 25
    %vm656 = vcmp.eq.s32.totalorder %v600, 26
    %vm657 = vcmp.eq.s32.totalorder %v601, 26
    %vm658 = vcmp.eq.s32.totalorder %v600, 27
    %vm659 = vcmp.eq.s32.totalorder %v601, 27
    %vm660 = vcmp.eq.s32.totalorder %v600, 28
    %vm661 = vcmp.eq.s32.totalorder %v601, 28
    %vm662 = vcmp.eq.s32.totalorder %v600, 29
    %vm663 = vcmp.eq.s32.totalorder %v601, 29
    %vm664 = vcmp.eq.s32.totalorder %v600, 30
    %vm665 = vcmp.eq.s32.totalorder %v601, 30
    %vm666 = vcmp.eq.s32.totalorder %v600, 31
    %vm667 = vcmp.eq.s32.totalorder %v601, 31
    %vm668 = vmand 1, %vm604
    %vm669 = vmand 1, %vm605
    %vm670 = vmand 1, %vm606
    %vm671 = vmand 1, %vm607
    %vm672 = vmand 1, %vm608
    %vm673 = vmand 1, %vm609
    %vm674 = vmand 1, %vm610
    %vm675 = vmand 1, %vm611
    %vm676 = vmand 1, %vm612
    %vm677 = vmand 1, %vm613
    %vm678 = vmand 1, %vm614
    %vm679 = vmand 1, %vm615
    %vm680 = vmand 1, %vm616
    %vm681 = vmand 1, %vm617
    %vm682 = vmand 1, %vm618
    %vm683 = vmand 1, %vm619
    %vm684 = vmand 1, %vm620
    %vm685 = vmand 1, %vm621
    %vm686 = vmand 1, %vm622
    %vm687 = vmand 1, %vm623
    %vm688 = vmand 1, %vm624
    %vm689 = vmand 1, %vm625
    %vm690 = vmand 1, %vm626
    %vm691 = vmand 1, %vm627
    %vm692 = vmand 1, %vm628
    %vm693 = vmand 1, %vm629
    %vm694 = vmand 1, %vm630
    %vm695 = vmand 1, %vm631
    %vm696 = vmand 1, %vm632
    %vm697 = vmand 1, %vm633
    %vm698 = vmand 1, %vm634
    %vm699 = vmand 1, %vm635
    %vm700 = vmand 0, %vm636
    %vm701 = vmand 0, %vm637
    %vm702 = vmand 0, %vm638
    %vm703 = vmand 0, %vm639
    %vm704 = vmand 0, %vm640
    %vm705 = vmand 0, %vm641
    %vm706 = vmand 0, %vm642
    %vm707 = vmand 0, %vm643
    %vm708 = vmand 0, %vm644
    %vm709 = vmand 0, %vm645
    %vm710 = vmand 0, %vm646
    %vm711 = vmand 0, %vm647
    %vm712 = vmand 0, %vm648
    %vm713 = vmand 0, %vm649
    %vm714 = vmand 0, %vm650
    %vm715 = vmand 0, %vm651
    %vm716 = vmand 0, %vm652
    %vm717 = vmand 0, %vm653
    %vm718 = vmand 0, %vm654
    %vm719 = vmand 0, %vm655
    %vm720 = vmand 0, %vm656
    %vm721 = vmand 0, %vm657
    %vm722 = vmand 0, %vm658
    %vm723 = vmand 0, %vm659
    %vm724 = vmand 0, %vm660
    %vm725 = vmand 0, %vm661
    %vm726 = vmand 0, %vm662
    %vm727 = vmand 0, %vm663
    %vm728 = vmand 0, %vm664
    %vm729 = vmand 0, %vm665
    %vm730 = vmand 0, %vm666
    %vm731 = vmand 0, %vm667
    %vm732 = vcmp.eq.s32.totalorder %v603, 4294967280
    %vm733 = vcmp.eq.s32.totalorder %v603, 4294967281
    %vm734 = vcmp.eq.s32.totalorder %v603, 4294967282
    %vm735 = vcmp.eq.s32.totalorder %v603, 4294967283
    %vm736 = vcmp.eq.s32.totalorder %v603, 4294967284
    %vm737 = vcmp.eq.s32.totalorder %v603, 4294967285
    %vm738 = vcmp.eq.s32.totalorder %v603, 4294967286
    %vm739 = vcmp.eq.s32.totalorder %v603, 4294967287
    %vm740 = vcmp.eq.s32.totalorder %v603, 4294967288
    %vm741 = vcmp.eq.s32.totalorder %v603, 4294967289
    %vm742 = vcmp.eq.s32.totalorder %v603, 4294967290
    %vm743 = vcmp.eq.s32.totalorder %v603, 4294967291
    %vm744 = vcmp.eq.s32.totalorder %v603, 4294967292
    %vm745 = vcmp.eq.s32.totalorder %v603, 4294967293
    %vm746 = vcmp.eq.s32.totalorder %v603, 4294967294
    %vm747 = vcmp.eq.s32.totalorder %v603, 4294967295
    %vm748 = vcmp.eq.s32.totalorder %v603, 0
    %vm749 = vcmp.eq.s32.totalorder %v603, 1
    %vm750 = vcmp.eq.s32.totalorder %v603, 2
    %vm751 = vcmp.eq.s32.totalorder %v603, 3
    %vm752 = vcmp.eq.s32.totalorder %v603, 4
    %vm753 = vcmp.eq.s32.totalorder %v603, 5
    %vm754 = vcmp.eq.s32.totalorder %v603, 6
    %vm755 = vcmp.eq.s32.totalorder %v603, 7
    %vm756 = vcmp.eq.s32.totalorder %v603, 8
    %vm757 = vcmp.eq.s32.totalorder %v603, 9
    %vm758 = vcmp.eq.s32.totalorder %v603, 10
    %vm759 = vcmp.eq.s32.totalorder %v603, 11
    %vm760 = vcmp.eq.s32.totalorder %v603, 12
    %vm761 = vcmp.eq.s32.totalorder %v603, 13
    %vm762 = vcmp.eq.s32.totalorder %v603, 14
    %vm763 = vcmp.eq.s32.totalorder %v603, 15
    %vm764 = vmand 0, %vm732
    %vm765 = vmand 0, %vm733
    %vm766 = vmand 0, %vm734
    %vm767 = vmand 0, %vm735
    %vm768 = vmand 0, %vm736
    %vm769 = vmand 0, %vm737
    %vm770 = vmand 0, %vm738
    %vm771 = vmand 0, %vm739
    %vm772 = vmand 0, %vm740
    %vm773 = vmand 0, %vm741
    %vm774 = vmand 0, %vm742
    %vm775 = vmand 0, %vm743
    %vm776 = vmand 0, %vm744
    %vm777 = vmand 0, %vm745
    %vm778 = vmand 0, %vm746
    %vm779 = vmand 0, %vm747
    %vm780 = vmand 1, %vm748
    %vm781 = vmand 1, %vm749
    %vm782 = vmand 1, %vm750
    %vm783 = vmand 1, %vm751
    %vm784 = vmand 1, %vm752
    %vm785 = vmand 1, %vm753
    %vm786 = vmand 1, %vm754
    %vm787 = vmand 1, %vm755
    %vm788 = vmand 1, %vm756
    %vm789 = vmand 1, %vm757
    %vm790 = vmand 1, %vm758
    %vm791 = vmand 1, %vm759
    %vm792 = vmand 1, %vm760
    %vm793 = vmand 1, %vm761
    %vm794 = vmand 1, %vm762
    %vm795 = vmand 1, %vm763
    %vm796 = vmor %vm668, %vm764
    %vm797 = vmor %vm669, %vm764
    %vm798 = vmor %vm670, %vm765
    %vm799 = vmor %vm671, %vm765
    %vm800 = vmor %vm672, %vm766
    %vm801 = vmor %vm673, %vm766
    %vm802 = vmor %vm674, %vm767
    %vm803 = vmor %vm675, %vm767
    %vm804 = vmor %vm676, %vm768
    %vm805 = vmor %vm677, %vm768
    %vm806 = vmor %vm678, %vm769
    %vm807 = vmor %vm679, %vm769
    %vm808 = vmor %vm680, %vm770
    %vm809 = vmor %vm681, %vm770
    %vm810 = vmor %vm682, %vm771
    %vm811 = vmor %vm683, %vm771
    %vm812 = vmor %vm684, %vm772
    %vm813 = vmor %vm685, %vm772
    %vm814 = vmor %vm686, %vm773
    %vm815 = vmor %vm687, %vm773
    %vm816 = vmor %vm688, %vm774
    %vm817 = vmor %vm689, %vm774
    %vm818 = vmor %vm690, %vm775
    %vm819 = vmor %vm691, %vm775
    %vm820 = vmor %vm692, %vm776
    %vm821 = vmor %vm693, %vm776
    %vm822 = vmor %vm694, %vm777
    %vm823 = vmor %vm695, %vm777
    %vm824 = vmor %vm696, %vm778
    %vm825 = vmor %vm697, %vm778
    %vm826 = vmor %vm698, %vm779
    %vm827 = vmor %vm699, %vm779
    %vm828 = vmor %vm700, %vm780
    %vm829 = vmor %vm701, %vm780
    %vm830 = vmor %vm702, %vm781
    %vm831 = vmor %vm703, %vm781
    %vm832 = vmor %vm704, %vm782
    %vm833 = vmor %vm705, %vm782
    %vm834 = vmor %vm706, %vm783
    %vm835 = vmor %vm707, %vm783
    %vm836 = vmor %vm708, %vm784
    %vm837 = vmor %vm709, %vm784
    %vm838 = vmor %vm710, %vm785
    %vm839 = vmor %vm711, %vm785
    %vm840 = vmor %vm712, %vm786
    %vm841 = vmor %vm713, %vm786
    %vm842 = vmor %vm714, %vm787
    %vm843 = vmor %vm715, %vm787
    %vm844 = vmor %vm716, %vm788
    %vm845 = vmor %vm717, %vm788
    %vm846 = vmor %vm718, %vm789
    %vm847 = vmor %vm719, %vm789
    %vm848 = vmor %vm720, %vm790
    %vm849 = vmor %vm721, %vm790
    %vm850 = vmor %vm722, %vm791
    %vm851 = vmor %vm723, %vm791
    %vm852 = vmor %vm724, %vm792
    %vm853 = vmor %vm725, %vm792
    %vm854 = vmor %vm726, %vm793
    %vm855 = vmor %vm727, %vm793
    %vm856 = vmor %vm728, %vm794
    %vm857 = vmor %vm729, %vm794
    %vm858 = vmor %vm730, %vm795
    %vm859 = vmor %vm731, %vm795
    %v860 = vsel %vm796, 1, 0
    %v861 = vsel %vm797, 1, 0
    %v862 = vsel %vm798, 1, 0
    %v863 = vsel %vm799, 1, 0
    %v864 = vsel %vm800, 1, 0
    %v865 = vsel %vm801, 1, 0
    %v866 = vsel %vm802, 1, 0
    %v867 = vsel %vm803, 1, 0
    %v868 = vsel %vm804, 1, 0
    %v869 = vsel %vm805, 1, 0
    %v870 = vsel %vm806, 1, 0
    %v871 = vsel %vm807, 1, 0
    %v872 = vsel %vm808, 1, 0
    %v873 = vsel %vm809, 1, 0
    %v874 = vsel %vm810, 1, 0
    %v875 = vsel %vm811, 1, 0
    %v876 = vsel %vm812, 1, 0
    %v877 = vsel %vm813, 1, 0
    %v878 = vsel %vm814, 1, 0
    %v879 = vsel %vm815, 1, 0
    %v880 = vsel %vm816, 1, 0
    %v881 = vsel %vm817, 1, 0
    %v882 = vsel %vm818, 1, 0
    %v883 = vsel %vm819, 1, 0
    %v884 = vsel %vm820, 1, 0
    %v885 = vsel %vm821, 1, 0
    %v886 = vsel %vm822, 1, 0
    %v887 = vsel %vm823, 1, 0
    %v888 = vsel %vm824, 1, 0
    %v889 = vsel %vm825, 1, 0
    %v890 = vsel %vm826, 1, 0
    %v891 = vsel %vm827, 1, 0
    %v892 = vsel %vm828, 1, 0
    %v893 = vsel %vm829, 1, 0
    %v894 = vsel %vm830, 1, 0
    %v895 = vsel %vm831, 1, 0
    %v896 = vsel %vm832, 1, 0
    %v897 = vsel %vm833, 1, 0
    %v898 = vsel %vm834, 1, 0
    %v899 = vsel %vm835, 1, 0
    %v900 = vsel %vm836, 1, 0
    %v901 = vsel %vm837, 1, 0
    %v902 = vsel %vm838, 1, 0
    %v903 = vsel %vm839, 1, 0
    %v904 = vsel %vm840, 1, 0
    %v905 = vsel %vm841, 1, 0
    %v906 = vsel %vm842, 1, 0
    %v907 = vsel %vm843, 1, 0
    %v908 = vsel %vm844, 1, 0
    %v909 = vsel %vm845, 1, 0
    %v910 = vsel %vm846, 1, 0
    %v911 = vsel %vm847, 1, 0
    %v912 = vsel %vm848, 1, 0
    %v913 = vsel %vm849, 1, 0
    %v914 = vsel %vm850, 1, 0
    %v915 = vsel %vm851, 1, 0
    %v916 = vsel %vm852, 1, 0
    %v917 = vsel %vm853, 1, 0
    %v918 = vsel %vm854, 1, 0
    %v919 = vsel %vm855, 1, 0
    %v920 = vsel %vm856, 1, 0
    %v921 = vsel %vm857, 1, 0
    %v922 = vsel %vm858, 1, 0
    %v923 = vsel %vm859, 1, 0
    %v924 = vcvt.s32.f32 %v860
    %v925 = vcvt.s32.f32 %v861
    %v926 = vcvt.s32.f32 %v862
    %v927 = vcvt.s32.f32 %v863
    %v928 = vcvt.s32.f32 %v864
    %v929 = vcvt.s32.f32 %v865
    %v930 = vcvt.s32.f32 %v866
    %v931 = vcvt.s32.f32 %v867
    %v932 = vcvt.s32.f32 %v868
    %v933 = vcvt.s32.f32 %v869
    %v934 = vcvt.s32.f32 %v870
    %v935 = vcvt.s32.f32 %v871
    %v936 = vcvt.s32.f32 %v872
    %v937 = vcvt.s32.f32 %v873
    %v938 = vcvt.s32.f32 %v874
    %v939 = vcvt.s32.f32 %v875
    %v940 = vcvt.s32.f32 %v876
    %v941 = vcvt.s32.f32 %v877
    %v942 = vcvt.s32.f32 %v878
    %v943 = vcvt.s32.f32 %v879
    %v944 = vcvt.s32.f32 %v880
    %v945 = vcvt.s32.f32 %v881
    %v946 = vcvt.s32.f32 %v882
    %v947 = vcvt.s32.f32 %v883
    %v948 = vcvt.s32.f32 %v884
    %v949 = vcvt.s32.f32 %v885
    %v950 = vcvt.s32.f32 %v886
    %v951 = vcvt.s32.f32 %v887
    %v952 = vcvt.s32.f32 %v888
    %v953 = vcvt.s32.f32 %v889
    %v954 = vcvt.s32.f32 %v890
    %v955 = vcvt.s32.f32 %v891
    %v956 = vcvt.s32.f32 %v892
    %v957 = vcvt.s32.f32 %v893
    %v958 = vcvt.s32.f32 %v894
    %v959 = vcvt.s32.f32 %v895
    %v960 = vcvt.s32.f32 %v896
    %v961 = vcvt.s32.f32 %v897
    %v962 = vcvt.s32.f32 %v898
    %v963 = vcvt.s32.f32 %v899
    %v964 = vcvt.s32.f32 %v900
    %v965 = vcvt.s32.f32 %v901
    %v966 = vcvt.s32.f32 %v902
    %v967 = vcvt.s32.f32 %v903
    %v968 = vcvt.s32.f32 %v904
    %v969 = vcvt.s32.f32 %v905
    %v970 = vcvt.s32.f32 %v906
    %v971 = vcvt.s32.f32 %v907
    %v972 = vcvt.s32.f32 %v908
    %v973 = vcvt.s32.f32 %v909
    %v974 = vcvt.s32.f32 %v910
    %v975 = vcvt.s32.f32 %v911
    %v976 = vcvt.s32.f32 %v912
    %v977 = vcvt.s32.f32 %v913
    %v978 = vcvt.s32.f32 %v914
    %v979 = vcvt.s32.f32 %v915
    %v980 = vcvt.s32.f32 %v916
    %v981 = vcvt.s32.f32 %v917
    %v982 = vcvt.s32.f32 %v918
    %v983 = vcvt.s32.f32 %v919
    %v984 = vcvt.s32.f32 %v920
    %v985 = vcvt.s32.f32 %v921
    %v986 = vcvt.s32.f32 %v922
    %v987 = vcvt.s32.f32 %v923
    %v988 = vcombine.low %v924, %v928
    %v989 = vcombine.high %v924, %v928
    %v991 = vunpack.c.l.s4 1983009808
    %v992 = vunpack.c.0.s8 %v991
    %v993 = vlaneseq
    %v994 = vshrl.u32 %v993, 7
    %v995 = vsub.s32 %v992, %v994
    %v996 = vrot.slane %v988, %v995
    %v998 = vunpack.c.l.s4 1983009808
    %v999 = vunpack.c.0.s8 %v998
    %v1000 = vlaneseq
    %v1001 = vshrl.u32 %v1000, 7
    %v1002 = vsub.s32 %v999, %v1001
    %v1003 = vrot.slane %v989, %v1002
    %v1004 = vcombine.low %v926, %v930
    %v1005 = vcombine.high %v926, %v930
    %v1007 = vunpack.c.l.s4 1983009808
    %v1008 = vunpack.c.0.s8 %v1007
    %v1009 = vlaneseq
    %v1010 = vshrl.u32 %v1009, 7
    %v1011 = vsub.s32 %v1008, %v1010
    %v1012 = vrot.slane %v1004, %v1011
    %v1014 = vunpack.c.l.s4 1983009808
    %v1015 = vunpack.c.0.s8 %v1014
    %v1016 = vlaneseq
    %v1017 = vshrl.u32 %v1016, 7
    %v1018 = vsub.s32 %v1015, %v1017
    %v1019 = vrot.slane %v1005, %v1018
    %v1020 = vcombine.low %v932, %v936
    %v1021 = vcombine.high %v932, %v936
    %v1023 = vunpack.c.l.s4 1983009808
    %v1024 = vunpack.c.0.s8 %v1023
    %v1025 = vlaneseq
    %v1026 = vshrl.u32 %v1025, 7
    %v1027 = vsub.s32 %v1024, %v1026
    %v1028 = vrot.slane %v1020, %v1027
    %v1030 = vunpack.c.l.s4 1983009808
    %v1031 = vunpack.c.0.s8 %v1030
    %v1032 = vlaneseq
    %v1033 = vshrl.u32 %v1032, 7
    %v1034 = vsub.s32 %v1031, %v1033
    %v1035 = vrot.slane %v1021, %v1034
    %v1036 = vcombine.low %v934, %v938
    %v1037 = vcombine.high %v934, %v938
    %v1039 = vunpack.c.l.s4 1983009808
    %v1040 = vunpack.c.0.s8 %v1039
    %v1041 = vlaneseq
    %v1042 = vshrl.u32 %v1041, 7
    %v1043 = vsub.s32 %v1040, %v1042
    %v1044 = vrot.slane %v1036, %v1043
    %v1046 = vunpack.c.l.s4 1983009808
    %v1047 = vunpack.c.0.s8 %v1046
    %v1048 = vlaneseq
    %v1049 = vshrl.u32 %v1048, 7
    %v1050 = vsub.s32 %v1047, %v1049
    %v1051 = vrot.slane %v1037, %v1050
    %v1052 = vcombine.low %v996, %v1012
    %v1053 = vcombine.high %v996, %v1012
    %v1055 = vunpack.c.l.s4 1934713408
    %v1056 = vunpack.c.0.s8 %v1055
    %v1057 = vlaneseq
    %v1058 = vshrl.u32 %v1057, 7
    %v1059 = vsub.s32 %v1056, %v1058
    %v1060 = vrot.slane %v1052, %v1059
    %v1062 = vunpack.c.l.s4 1934713408
    %v1063 = vunpack.c.0.s8 %v1062
    %v1064 = vlaneseq
    %v1065 = vshrl.u32 %v1064, 7
    %v1066 = vsub.s32 %v1063, %v1065
    %v1067 = vrot.slane %v1053, %v1066
    %v1068 = vcombine.low %v1003, %v1019
    %v1069 = vcombine.high %v1003, %v1019
    %v1071 = vunpack.c.l.s4 1934713408
    %v1072 = vunpack.c.0.s8 %v1071
    %v1073 = vlaneseq
    %v1074 = vshrl.u32 %v1073, 7
    %v1075 = vsub.s32 %v1072, %v1074
    %v1076 = vrot.slane %v1068, %v1075
    %v1078 = vunpack.c.l.s4 1934713408
    %v1079 = vunpack.c.0.s8 %v1078
    %v1080 = vlaneseq
    %v1081 = vshrl.u32 %v1080, 7
    %v1082 = vsub.s32 %v1079, %v1081
    %v1083 = vrot.slane %v1069, %v1082
    %v1084 = vcombine.low %v1028, %v1044
    %v1085 = vcombine.high %v1028, %v1044
    %v1087 = vunpack.c.l.s4 1934713408
    %v1088 = vunpack.c.0.s8 %v1087
    %v1089 = vlaneseq
    %v1090 = vshrl.u32 %v1089, 7
    %v1091 = vsub.s32 %v1088, %v1090
    %v1092 = vrot.slane %v1084, %v1091
    %v1094 = vunpack.c.l.s4 1934713408
    %v1095 = vunpack.c.0.s8 %v1094
    %v1096 = vlaneseq
    %v1097 = vshrl.u32 %v1096, 7
    %v1098 = vsub.s32 %v1095, %v1097
    %v1099 = vrot.slane %v1085, %v1098
    %v1100 = vcombine.low %v1035, %v1051
    %v1101 = vcombine.high %v1035, %v1051
    %v1103 = vunpack.c.l.s4 1934713408
    %v1104 = vunpack.c.0.s8 %v1103
    %v1105 = vlaneseq
    %v1106 = vshrl.u32 %v1105, 7
    %v1107 = vsub.s32 %v1104, %v1106
    %v1108 = vrot.slane %v1100, %v1107
    %v1110 = vunpack.c.l.s4 1934713408
    %v1111 = vunpack.c.0.s8 %v1110
    %v1112 = vlaneseq
    %v1113 = vshrl.u32 %v1112, 7
    %v1114 = vsub.s32 %v1111, %v1113
    %v1115 = vrot.slane %v1101, %v1114
    %v1116 = vcombine.low %v1060, %v1092
    %v1117 = vcombine.high %v1060, %v1092
    %v1118 = vcombine.low %v1067, %v1099
    %v1119 = vcombine.high %v1067, %v1099
    %v1120 = vcombine.low %v1076, %v1108
    %v1121 = vcombine.high %v1076, %v1108
    %v1122 = vcombine.low %v1083, %v1115
    %v1123 = vcombine.high %v1083, %v1115
    %v1124 = vcombine.low %v940, %v944
    %v1125 = vcombine.high %v940, %v944
    %v1127 = vunpack.c.l.s4 1983009808
    %v1128 = vunpack.c.0.s8 %v1127
    %v1129 = vlaneseq
    %v1130 = vshrl.u32 %v1129, 7
    %v1131 = vsub.s32 %v1128, %v1130
    %v1132 = vrot.slane %v1124, %v1131
    %v1134 = vunpack.c.l.s4 1983009808
    %v1135 = vunpack.c.0.s8 %v1134
    %v1136 = vlaneseq
    %v1137 = vshrl.u32 %v1136, 7
    %v1138 = vsub.s32 %v1135, %v1137
    %v1139 = vrot.slane %v1125, %v1138
    %v1140 = vcombine.low %v942, %v946
    %v1141 = vcombine.high %v942, %v946
    %v1143 = vunpack.c.l.s4 1983009808
    %v1144 = vunpack.c.0.s8 %v1143
    %v1145 = vlaneseq
    %v1146 = vshrl.u32 %v1145, 7
    %v1147 = vsub.s32 %v1144, %v1146
    %v1148 = vrot.slane %v1140, %v1147
    %v1150 = vunpack.c.l.s4 1983009808
    %v1151 = vunpack.c.0.s8 %v1150
    %v1152 = vlaneseq
    %v1153 = vshrl.u32 %v1152, 7
    %v1154 = vsub.s32 %v1151, %v1153
    %v1155 = vrot.slane %v1141, %v1154
    %v1156 = vcombine.low %v948, %v952
    %v1157 = vcombine.high %v948, %v952
    %v1159 = vunpack.c.l.s4 1983009808
    %v1160 = vunpack.c.0.s8 %v1159
    %v1161 = vlaneseq
    %v1162 = vshrl.u32 %v1161, 7
    %v1163 = vsub.s32 %v1160, %v1162
    %v1164 = vrot.slane %v1156, %v1163
    %v1166 = vunpack.c.l.s4 1983009808
    %v1167 = vunpack.c.0.s8 %v1166
    %v1168 = vlaneseq
    %v1169 = vshrl.u32 %v1168, 7
    %v1170 = vsub.s32 %v1167, %v1169
    %v1171 = vrot.slane %v1157, %v1170
    %v1172 = vcombine.low %v950, %v954
    %v1173 = vcombine.high %v950, %v954
    %v1175 = vunpack.c.l.s4 1983009808
    %v1176 = vunpack.c.0.s8 %v1175
    %v1177 = vlaneseq
    %v1178 = vshrl.u32 %v1177, 7
    %v1179 = vsub.s32 %v1176, %v1178
    %v1180 = vrot.slane %v1172, %v1179
    %v1182 = vunpack.c.l.s4 1983009808
    %v1183 = vunpack.c.0.s8 %v1182
    %v1184 = vlaneseq
    %v1185 = vshrl.u32 %v1184, 7
    %v1186 = vsub.s32 %v1183, %v1185
    %v1187 = vrot.slane %v1173, %v1186
    %v1188 = vcombine.low %v1132, %v1148
    %v1189 = vcombine.high %v1132, %v1148
    %v1191 = vunpack.c.l.s4 1934713408
    %v1192 = vunpack.c.0.s8 %v1191
    %v1193 = vlaneseq
    %v1194 = vshrl.u32 %v1193, 7
    %v1195 = vsub.s32 %v1192, %v1194
    %v1196 = vrot.slane %v1188, %v1195
    %v1198 = vunpack.c.l.s4 1934713408
    %v1199 = vunpack.c.0.s8 %v1198
    %v1200 = vlaneseq
    %v1201 = vshrl.u32 %v1200, 7
    %v1202 = vsub.s32 %v1199, %v1201
    %v1203 = vrot.slane %v1189, %v1202
    %v1204 = vcombine.low %v1139, %v1155
    %v1205 = vcombine.high %v1139, %v1155
    %v1207 = vunpack.c.l.s4 1934713408
    %v1208 = vunpack.c.0.s8 %v1207
    %v1209 = vlaneseq
    %v1210 = vshrl.u32 %v1209, 7
    %v1211 = vsub.s32 %v1208, %v1210
    %v1212 = vrot.slane %v1204, %v1211
    %v1214 = vunpack.c.l.s4 1934713408
    %v1215 = vunpack.c.0.s8 %v1214
    %v1216 = vlaneseq
    %v1217 = vshrl.u32 %v1216, 7
    %v1218 = vsub.s32 %v1215, %v1217
    %v1219 = vrot.slane %v1205, %v1218
    %v1220 = vcombine.low %v1164, %v1180
    %v1221 = vcombine.high %v1164, %v1180
    %v1223 = vunpack.c.l.s4 1934713408
    %v1224 = vunpack.c.0.s8 %v1223
    %v1225 = vlaneseq
    %v1226 = vshrl.u32 %v1225, 7
    %v1227 = vsub.s32 %v1224, %v1226
    %v1228 = vrot.slane %v1220, %v1227
    %v1230 = vunpack.c.l.s4 1934713408
    %v1231 = vunpack.c.0.s8 %v1230
    %v1232 = vlaneseq
    %v1233 = vshrl.u32 %v1232, 7
    %v1234 = vsub.s32 %v1231, %v1233
    %v1235 = vrot.slane %v1221, %v1234
    %v1236 = vcombine.low %v1171, %v1187
    %v1237 = vcombine.high %v1171, %v1187
    %v1239 = vunpack.c.l.s4 1934713408
    %v1240 = vunpack.c.0.s8 %v1239
    %v1241 = vlaneseq
    %v1242 = vshrl.u32 %v1241, 7
    %v1243 = vsub.s32 %v1240, %v1242
    %v1244 = vrot.slane %v1236, %v1243
    %v1246 = vunpack.c.l.s4 1934713408
    %v1247 = vunpack.c.0.s8 %v1246
    %v1248 = vlaneseq
    %v1249 = vshrl.u32 %v1248, 7
    %v1250 = vsub.s32 %v1247, %v1249
    %v1251 = vrot.slane %v1237, %v1250
    %v1252 = vcombine.low %v1196, %v1228
    %v1253 = vcombine.high %v1196, %v1228
    %v1254 = vcombine.low %v1203, %v1235
    %v1255 = vcombine.high %v1203, %v1235
    %v1256 = vcombine.low %v1212, %v1244
    %v1257 = vcombine.high %v1212, %v1244
    %v1258 = vcombine.low %v1219, %v1251
    %v1259 = vcombine.high %v1219, %v1251
    %v1260 = vcombine.low %v956, %v960
    %v1261 = vcombine.high %v956, %v960
    %v1263 = vunpack.c.l.s4 1983009808
    %v1264 = vunpack.c.0.s8 %v1263
    %v1265 = vlaneseq
    %v1266 = vshrl.u32 %v1265, 7
    %v1267 = vsub.s32 %v1264, %v1266
    %v1268 = vrot.slane %v1260, %v1267
    %v1270 = vunpack.c.l.s4 1983009808
    %v1271 = vunpack.c.0.s8 %v1270
    %v1272 = vlaneseq
    %v1273 = vshrl.u32 %v1272, 7
    %v1274 = vsub.s32 %v1271, %v1273
    %v1275 = vrot.slane %v1261, %v1274
    %v1276 = vcombine.low %v958, %v962
    %v1277 = vcombine.high %v958, %v962
    %v1279 = vunpack.c.l.s4 1983009808
    %v1280 = vunpack.c.0.s8 %v1279
    %v1281 = vlaneseq
    %v1282 = vshrl.u32 %v1281, 7
    %v1283 = vsub.s32 %v1280, %v1282
    %v1284 = vrot.slane %v1276, %v1283
    %v1286 = vunpack.c.l.s4 1983009808
    %v1287 = vunpack.c.0.s8 %v1286
    %v1288 = vlaneseq
    %v1289 = vshrl.u32 %v1288, 7
    %v1290 = vsub.s32 %v1287, %v1289
    %v1291 = vrot.slane %v1277, %v1290
    %v1292 = vcombine.low %v964, %v968
    %v1293 = vcombine.high %v964, %v968
    %v1295 = vunpack.c.l.s4 1983009808
    %v1296 = vunpack.c.0.s8 %v1295
    %v1297 = vlaneseq
    %v1298 = vshrl.u32 %v1297, 7
    %v1299 = vsub.s32 %v1296, %v1298
    %v1300 = vrot.slane %v1292, %v1299
    %v1302 = vunpack.c.l.s4 1983009808
    %v1303 = vunpack.c.0.s8 %v1302
    %v1304 = vlaneseq
    %v1305 = vshrl.u32 %v1304, 7
    %v1306 = vsub.s32 %v1303, %v1305
    %v1307 = vrot.slane %v1293, %v1306
    %v1308 = vcombine.low %v966, %v970
    %v1309 = vcombine.high %v966, %v970
    %v1311 = vunpack.c.l.s4 1983009808
    %v1312 = vunpack.c.0.s8 %v1311
    %v1313 = vlaneseq
    %v1314 = vshrl.u32 %v1313, 7
    %v1315 = vsub.s32 %v1312, %v1314
    %v1316 = vrot.slane %v1308, %v1315
    %v1318 = vunpack.c.l.s4 1983009808
    %v1319 = vunpack.c.0.s8 %v1318
    %v1320 = vlaneseq
    %v1321 = vshrl.u32 %v1320, 7
    %v1322 = vsub.s32 %v1319, %v1321
    %v1323 = vrot.slane %v1309, %v1322
    %v1324 = vcombine.low %v1268, %v1284
    %v1325 = vcombine.high %v1268, %v1284
    %v1327 = vunpack.c.l.s4 1934713408
    %v1328 = vunpack.c.0.s8 %v1327
    %v1329 = vlaneseq
    %v1330 = vshrl.u32 %v1329, 7
    %v1331 = vsub.s32 %v1328, %v1330
    %v1332 = vrot.slane %v1324, %v1331
    %v1334 = vunpack.c.l.s4 1934713408
    %v1335 = vunpack.c.0.s8 %v1334
    %v1336 = vlaneseq
    %v1337 = vshrl.u32 %v1336, 7
    %v1338 = vsub.s32 %v1335, %v1337
    %v1339 = vrot.slane %v1325, %v1338
    %v1340 = vcombine.low %v1275, %v1291
    %v1341 = vcombine.high %v1275, %v1291
    %v1343 = vunpack.c.l.s4 1934713408
    %v1344 = vunpack.c.0.s8 %v1343
    %v1345 = vlaneseq
    %v1346 = vshrl.u32 %v1345, 7
    %v1347 = vsub.s32 %v1344, %v1346
    %v1348 = vrot.slane %v1340, %v1347
    %v1350 = vunpack.c.l.s4 1934713408
    %v1351 = vunpack.c.0.s8 %v1350
    %v1352 = vlaneseq
    %v1353 = vshrl.u32 %v1352, 7
    %v1354 = vsub.s32 %v1351, %v1353
    %v1355 = vrot.slane %v1341, %v1354
    %v1356 = vcombine.low %v1300, %v1316
    %v1357 = vcombine.high %v1300, %v1316
    %v1359 = vunpack.c.l.s4 1934713408
    %v1360 = vunpack.c.0.s8 %v1359
    %v1361 = vlaneseq
    %v1362 = vshrl.u32 %v1361, 7
    %v1363 = vsub.s32 %v1360, %v1362
    %v1364 = vrot.slane %v1356, %v1363
    %v1366 = vunpack.c.l.s4 1934713408
    %v1367 = vunpack.c.0.s8 %v1366
    %v1368 = vlaneseq
    %v1369 = vshrl.u32 %v1368, 7
    %v1370 = vsub.s32 %v1367, %v1369
    %v1371 = vrot.slane %v1357, %v1370
    %v1372 = vcombine.low %v1307, %v1323
    %v1373 = vcombine.high %v1307, %v1323
    %v1375 = vunpack.c.l.s4 1934713408
    %v1376 = vunpack.c.0.s8 %v1375
    %v1377 = vlaneseq
    %v1378 = vshrl.u32 %v1377, 7
    %v1379 = vsub.s32 %v1376, %v1378
    %v1380 = vrot.slane %v1372, %v1379
    %v1382 = vunpack.c.l.s4 1934713408
    %v1383 = vunpack.c.0.s8 %v1382
    %v1384 = vlaneseq
    %v1385 = vshrl.u32 %v1384, 7
    %v1386 = vsub.s32 %v1383, %v1385
    %v1387 = vrot.slane %v1373, %v1386
    %v1388 = vcombine.low %v1332, %v1364
    %v1389 = vcombine.high %v1332, %v1364
    %v1390 = vcombine.low %v1339, %v1371
    %v1391 = vcombine.high %v1339, %v1371
    %v1392 = vcombine.low %v1348, %v1380
    %v1393 = vcombine.high %v1348, %v1380
    %v1394 = vcombine.low %v1355, %v1387
    %v1395 = vcombine.high %v1355, %v1387
    %v1396 = vcombine.low %v972, %v976
    %v1397 = vcombine.high %v972, %v976
    %v1399 = vunpack.c.l.s4 1983009808
    %v1400 = vunpack.c.0.s8 %v1399
    %v1401 = vlaneseq
    %v1402 = vshrl.u32 %v1401, 7
    %v1403 = vsub.s32 %v1400, %v1402
    %v1404 = vrot.slane %v1396, %v1403
    %v1406 = vunpack.c.l.s4 1983009808
    %v1407 = vunpack.c.0.s8 %v1406
    %v1408 = vlaneseq
    %v1409 = vshrl.u32 %v1408, 7
    %v1410 = vsub.s32 %v1407, %v1409
    %v1411 = vrot.slane %v1397, %v1410
    %v1412 = vcombine.low %v974, %v978
    %v1413 = vcombine.high %v974, %v978
    %v1415 = vunpack.c.l.s4 1983009808
    %v1416 = vunpack.c.0.s8 %v1415
    %v1417 = vlaneseq
    %v1418 = vshrl.u32 %v1417, 7
    %v1419 = vsub.s32 %v1416, %v1418
    %v1420 = vrot.slane %v1412, %v1419
    %v1422 = vunpack.c.l.s4 1983009808
    %v1423 = vunpack.c.0.s8 %v1422
    %v1424 = vlaneseq
    %v1425 = vshrl.u32 %v1424, 7
    %v1426 = vsub.s32 %v1423, %v1425
    %v1427 = vrot.slane %v1413, %v1426
    %v1428 = vcombine.low %v980, %v984
    %v1429 = vcombine.high %v980, %v984
    %v1431 = vunpack.c.l.s4 1983009808
    %v1432 = vunpack.c.0.s8 %v1431
    %v1433 = vlaneseq
    %v1434 = vshrl.u32 %v1433, 7
    %v1435 = vsub.s32 %v1432, %v1434
    %v1436 = vrot.slane %v1428, %v1435
    %v1438 = vunpack.c.l.s4 1983009808
    %v1439 = vunpack.c.0.s8 %v1438
    %v1440 = vlaneseq
    %v1441 = vshrl.u32 %v1440, 7
    %v1442 = vsub.s32 %v1439, %v1441
    %v1443 = vrot.slane %v1429, %v1442
    %v1444 = vcombine.low %v982, %v986
    %v1445 = vcombine.high %v982, %v986
    %v1447 = vunpack.c.l.s4 1983009808
    %v1448 = vunpack.c.0.s8 %v1447
    %v1449 = vlaneseq
    %v1450 = vshrl.u32 %v1449, 7
    %v1451 = vsub.s32 %v1448, %v1450
    %v1452 = vrot.slane %v1444, %v1451
    %v1454 = vunpack.c.l.s4 1983009808
    %v1455 = vunpack.c.0.s8 %v1454
    %v1456 = vlaneseq
    %v1457 = vshrl.u32 %v1456, 7
    %v1458 = vsub.s32 %v1455, %v1457
    %v1459 = vrot.slane %v1445, %v1458
    %v1460 = vcombine.low %v1404, %v1420
    %v1461 = vcombine.high %v1404, %v1420
    %v1463 = vunpack.c.l.s4 1934713408
    %v1464 = vunpack.c.0.s8 %v1463
    %v1465 = vlaneseq
    %v1466 = vshrl.u32 %v1465, 7
    %v1467 = vsub.s32 %v1464, %v1466
    %v1468 = vrot.slane %v1460, %v1467
    %v1470 = vunpack.c.l.s4 1934713408
    %v1471 = vunpack.c.0.s8 %v1470
    %v1472 = vlaneseq
    %v1473 = vshrl.u32 %v1472, 7
    %v1474 = vsub.s32 %v1471, %v1473
    %v1475 = vrot.slane %v1461, %v1474
    %v1476 = vcombine.low %v1411, %v1427
    %v1477 = vcombine.high %v1411, %v1427
    %v1479 = vunpack.c.l.s4 1934713408
    %v1480 = vunpack.c.0.s8 %v1479
    %v1481 = vlaneseq
    %v1482 = vshrl.u32 %v1481, 7
    %v1483 = vsub.s32 %v1480, %v1482
    %v1484 = vrot.slane %v1476, %v1483
    %v1486 = vunpack.c.l.s4 1934713408
    %v1487 = vunpack.c.0.s8 %v1486
    %v1488 = vlaneseq
    %v1489 = vshrl.u32 %v1488, 7
    %v1490 = vsub.s32 %v1487, %v1489
    %v1491 = vrot.slane %v1477, %v1490
    %v1492 = vcombine.low %v1436, %v1452
    %v1493 = vcombine.high %v1436, %v1452
    %v1495 = vunpack.c.l.s4 1934713408
    %v1496 = vunpack.c.0.s8 %v1495
    %v1497 = vlaneseq
    %v1498 = vshrl.u32 %v1497, 7
    %v1499 = vsub.s32 %v1496, %v1498
    %v1500 = vrot.slane %v1492, %v1499
    %v1502 = vunpack.c.l.s4 1934713408
    %v1503 = vunpack.c.0.s8 %v1502
    %v1504 = vlaneseq
    %v1505 = vshrl.u32 %v1504, 7
    %v1506 = vsub.s32 %v1503, %v1505
    %v1507 = vrot.slane %v1493, %v1506
    %v1508 = vcombine.low %v1443, %v1459
    %v1509 = vcombine.high %v1443, %v1459
    %v1511 = vunpack.c.l.s4 1934713408
    %v1512 = vunpack.c.0.s8 %v1511
    %v1513 = vlaneseq
    %v1514 = vshrl.u32 %v1513, 7
    %v1515 = vsub.s32 %v1512, %v1514
    %v1516 = vrot.slane %v1508, %v1515
    %v1518 = vunpack.c.l.s4 1934713408
    %v1519 = vunpack.c.0.s8 %v1518
    %v1520 = vlaneseq
    %v1521 = vshrl.u32 %v1520, 7
    %v1522 = vsub.s32 %v1519, %v1521
    %v1523 = vrot.slane %v1509, %v1522
    %v1524 = vcombine.low %v1468, %v1500
    %v1525 = vcombine.high %v1468, %v1500
    %v1526 = vcombine.low %v1475, %v1507
    %v1527 = vcombine.high %v1475, %v1507
    %v1528 = vcombine.low %v1484, %v1516
    %v1529 = vcombine.high %v1484, %v1516
    %v1530 = vcombine.low %v1491, %v1523
    %v1531 = vcombine.high %v1491, %v1523
    %v1532 = vcombine.low %v925, %v929
    %v1533 = vcombine.high %v925, %v929
    %v1535 = vunpack.c.l.s4 1983009808
    %v1536 = vunpack.c.0.s8 %v1535
    %v1537 = vlaneseq
    %v1538 = vshrl.u32 %v1537, 7
    %v1539 = vsub.s32 %v1536, %v1538
    %v1540 = vrot.slane %v1532, %v1539
    %v1542 = vunpack.c.l.s4 1983009808
    %v1543 = vunpack.c.0.s8 %v1542
    %v1544 = vlaneseq
    %v1545 = vshrl.u32 %v1544, 7
    %v1546 = vsub.s32 %v1543, %v1545
    %v1547 = vrot.slane %v1533, %v1546
    %v1548 = vcombine.low %v927, %v931
    %v1549 = vcombine.high %v927, %v931
    %v1551 = vunpack.c.l.s4 1983009808
    %v1552 = vunpack.c.0.s8 %v1551
    %v1553 = vlaneseq
    %v1554 = vshrl.u32 %v1553, 7
    %v1555 = vsub.s32 %v1552, %v1554
    %v1556 = vrot.slane %v1548, %v1555
    %v1558 = vunpack.c.l.s4 1983009808
    %v1559 = vunpack.c.0.s8 %v1558
    %v1560 = vlaneseq
    %v1561 = vshrl.u32 %v1560, 7
    %v1562 = vsub.s32 %v1559, %v1561
    %v1563 = vrot.slane %v1549, %v1562
    %v1564 = vcombine.low %v933, %v937
    %v1565 = vcombine.high %v933, %v937
    %v1567 = vunpack.c.l.s4 1983009808
    %v1568 = vunpack.c.0.s8 %v1567
    %v1569 = vlaneseq
    %v1570 = vshrl.u32 %v1569, 7
    %v1571 = vsub.s32 %v1568, %v1570
    %v1572 = vrot.slane %v1564, %v1571
    %v1574 = vunpack.c.l.s4 1983009808
    %v1575 = vunpack.c.0.s8 %v1574
    %v1576 = vlaneseq
    %v1577 = vshrl.u32 %v1576, 7
    %v1578 = vsub.s32 %v1575, %v1577
    %v1579 = vrot.slane %v1565, %v1578
    %v1580 = vcombine.low %v935, %v939
    %v1581 = vcombine.high %v935, %v939
    %v1583 = vunpack.c.l.s4 1983009808
    %v1584 = vunpack.c.0.s8 %v1583
    %v1585 = vlaneseq
    %v1586 = vshrl.u32 %v1585, 7
    %v1587 = vsub.s32 %v1584, %v1586
    %v1588 = vrot.slane %v1580, %v1587
    %v1590 = vunpack.c.l.s4 1983009808
    %v1591 = vunpack.c.0.s8 %v1590
    %v1592 = vlaneseq
    %v1593 = vshrl.u32 %v1592, 7
    %v1594 = vsub.s32 %v1591, %v1593
    %v1595 = vrot.slane %v1581, %v1594
    %v1596 = vcombine.low %v1540, %v1556
    %v1597 = vcombine.high %v1540, %v1556
    %v1599 = vunpack.c.l.s4 1934713408
    %v1600 = vunpack.c.0.s8 %v1599
    %v1601 = vlaneseq
    %v1602 = vshrl.u32 %v1601, 7
    %v1603 = vsub.s32 %v1600, %v1602
    %v1604 = vrot.slane %v1596, %v1603
    %v1606 = vunpack.c.l.s4 1934713408
    %v1607 = vunpack.c.0.s8 %v1606
    %v1608 = vlaneseq
    %v1609 = vshrl.u32 %v1608, 7
    %v1610 = vsub.s32 %v1607, %v1609
    %v1611 = vrot.slane %v1597, %v1610
    %v1612 = vcombine.low %v1547, %v1563
    %v1613 = vcombine.high %v1547, %v1563
    %v1615 = vunpack.c.l.s4 1934713408
    %v1616 = vunpack.c.0.s8 %v1615
    %v1617 = vlaneseq
    %v1618 = vshrl.u32 %v1617, 7
    %v1619 = vsub.s32 %v1616, %v1618
    %v1620 = vrot.slane %v1612, %v1619
    %v1622 = vunpack.c.l.s4 1934713408
    %v1623 = vunpack.c.0.s8 %v1622
    %v1624 = vlaneseq
    %v1625 = vshrl.u32 %v1624, 7
    %v1626 = vsub.s32 %v1623, %v1625
    %v1627 = vrot.slane %v1613, %v1626
    %v1628 = vcombine.low %v1572, %v1588
    %v1629 = vcombine.high %v1572, %v1588
    %v1631 = vunpack.c.l.s4 1934713408
    %v1632 = vunpack.c.0.s8 %v1631
    %v1633 = vlaneseq
    %v1634 = vshrl.u32 %v1633, 7
    %v1635 = vsub.s32 %v1632, %v1634
    %v1636 = vrot.slane %v1628, %v1635
    %v1638 = vunpack.c.l.s4 1934713408
    %v1639 = vunpack.c.0.s8 %v1638
    %v1640 = vlaneseq
    %v1641 = vshrl.u32 %v1640, 7
    %v1642 = vsub.s32 %v1639, %v1641
    %v1643 = vrot.slane %v1629, %v1642
    %v1644 = vcombine.low %v1579, %v1595
    %v1645 = vcombine.high %v1579, %v1595
    %v1647 = vunpack.c.l.s4 1934713408
    %v1648 = vunpack.c.0.s8 %v1647
    %v1649 = vlaneseq
    %v1650 = vshrl.u32 %v1649, 7
    %v1651 = vsub.s32 %v1648, %v1650
    %v1652 = vrot.slane %v1644, %v1651
    %v1654 = vunpack.c.l.s4 1934713408
    %v1655 = vunpack.c.0.s8 %v1654
    %v1656 = vlaneseq
    %v1657 = vshrl.u32 %v1656, 7
    %v1658 = vsub.s32 %v1655, %v1657
    %v1659 = vrot.slane %v1645, %v1658
    %v1660 = vcombine.low %v1604, %v1636
    %v1661 = vcombine.high %v1604, %v1636
    %v1662 = vcombine.low %v1611, %v1643
    %v1663 = vcombine.high %v1611, %v1643
    %v1664 = vcombine.low %v1620, %v1652
    %v1665 = vcombine.high %v1620, %v1652
    %v1666 = vcombine.low %v1627, %v1659
    %v1667 = vcombine.high %v1627, %v1659
    %v1668 = vcombine.low %v941, %v945
    %v1669 = vcombine.high %v941, %v945
    %v1671 = vunpack.c.l.s4 1983009808
    %v1672 = vunpack.c.0.s8 %v1671
    %v1673 = vlaneseq
    %v1674 = vshrl.u32 %v1673, 7
    %v1675 = vsub.s32 %v1672, %v1674
    %v1676 = vrot.slane %v1668, %v1675
    %v1678 = vunpack.c.l.s4 1983009808
    %v1679 = vunpack.c.0.s8 %v1678
    %v1680 = vlaneseq
    %v1681 = vshrl.u32 %v1680, 7
    %v1682 = vsub.s32 %v1679, %v1681
    %v1683 = vrot.slane %v1669, %v1682
    %v1684 = vcombine.low %v943, %v947
    %v1685 = vcombine.high %v943, %v947
    %v1687 = vunpack.c.l.s4 1983009808
    %v1688 = vunpack.c.0.s8 %v1687
    %v1689 = vlaneseq
    %v1690 = vshrl.u32 %v1689, 7
    %v1691 = vsub.s32 %v1688, %v1690
    %v1692 = vrot.slane %v1684, %v1691
    %v1694 = vunpack.c.l.s4 1983009808
    %v1695 = vunpack.c.0.s8 %v1694
    %v1696 = vlaneseq
    %v1697 = vshrl.u32 %v1696, 7
    %v1698 = vsub.s32 %v1695, %v1697
    %v1699 = vrot.slane %v1685, %v1698
    %v1700 = vcombine.low %v949, %v953
    %v1701 = vcombine.high %v949, %v953
    %v1703 = vunpack.c.l.s4 1983009808
    %v1704 = vunpack.c.0.s8 %v1703
    %v1705 = vlaneseq
    %v1706 = vshrl.u32 %v1705, 7
    %v1707 = vsub.s32 %v1704, %v1706
    %v1708 = vrot.slane %v1700, %v1707
    %v1710 = vunpack.c.l.s4 1983009808
    %v1711 = vunpack.c.0.s8 %v1710
    %v1712 = vlaneseq
    %v1713 = vshrl.u32 %v1712, 7
    %v1714 = vsub.s32 %v1711, %v1713
    %v1715 = vrot.slane %v1701, %v1714
    %v1716 = vcombine.low %v951, %v955
    %v1717 = vcombine.high %v951, %v955
    %v1719 = vunpack.c.l.s4 1983009808
    %v1720 = vunpack.c.0.s8 %v1719
    %v1721 = vlaneseq
    %v1722 = vshrl.u32 %v1721, 7
    %v1723 = vsub.s32 %v1720, %v1722
    %v1724 = vrot.slane %v1716, %v1723
    %v1726 = vunpack.c.l.s4 1983009808
    %v1727 = vunpack.c.0.s8 %v1726
    %v1728 = vlaneseq
    %v1729 = vshrl.u32 %v1728, 7
    %v1730 = vsub.s32 %v1727, %v1729
    %v1731 = vrot.slane %v1717, %v1730
    %v1732 = vcombine.low %v1676, %v1692
    %v1733 = vcombine.high %v1676, %v1692
    %v1735 = vunpack.c.l.s4 1934713408
    %v1736 = vunpack.c.0.s8 %v1735
    %v1737 = vlaneseq
    %v1738 = vshrl.u32 %v1737, 7
    %v1739 = vsub.s32 %v1736, %v1738
    %v1740 = vrot.slane %v1732, %v1739
    %v1742 = vunpack.c.l.s4 1934713408
    %v1743 = vunpack.c.0.s8 %v1742
    %v1744 = vlaneseq
    %v1745 = vshrl.u32 %v1744, 7
    %v1746 = vsub.s32 %v1743, %v1745
    %v1747 = vrot.slane %v1733, %v1746
    %v1748 = vcombine.low %v1683, %v1699
    %v1749 = vcombine.high %v1683, %v1699
    %v1751 = vunpack.c.l.s4 1934713408
    %v1752 = vunpack.c.0.s8 %v1751
    %v1753 = vlaneseq
    %v1754 = vshrl.u32 %v1753, 7
    %v1755 = vsub.s32 %v1752, %v1754
    %v1756 = vrot.slane %v1748, %v1755
    %v1758 = vunpack.c.l.s4 1934713408
    %v1759 = vunpack.c.0.s8 %v1758
    %v1760 = vlaneseq
    %v1761 = vshrl.u32 %v1760, 7
    %v1762 = vsub.s32 %v1759, %v1761
    %v1763 = vrot.slane %v1749, %v1762
    %v1764 = vcombine.low %v1708, %v1724
    %v1765 = vcombine.high %v1708, %v1724
    %v1767 = vunpack.c.l.s4 1934713408
    %v1768 = vunpack.c.0.s8 %v1767
    %v1769 = vlaneseq
    %v1770 = vshrl.u32 %v1769, 7
    %v1771 = vsub.s32 %v1768, %v1770
    %v1772 = vrot.slane %v1764, %v1771
    %v1774 = vunpack.c.l.s4 1934713408
    %v1775 = vunpack.c.0.s8 %v1774
    %v1776 = vlaneseq
    %v1777 = vshrl.u32 %v1776, 7
    %v1778 = vsub.s32 %v1775, %v1777
    %v1779 = vrot.slane %v1765, %v1778
    %v1780 = vcombine.low %v1715, %v1731
    %v1781 = vcombine.high %v1715, %v1731
    %v1783 = vunpack.c.l.s4 1934713408
    %v1784 = vunpack.c.0.s8 %v1783
    %v1785 = vlaneseq
    %v1786 = vshrl.u32 %v1785, 7
    %v1787 = vsub.s32 %v1784, %v1786
    %v1788 = vrot.slane %v1780, %v1787
    %v1790 = vunpack.c.l.s4 1934713408
    %v1791 = vunpack.c.0.s8 %v1790
    %v1792 = vlaneseq
    %v1793 = vshrl.u32 %v1792, 7
    %v1794 = vsub.s32 %v1791, %v1793
    %v1795 = vrot.slane %v1781, %v1794
    %v1796 = vcombine.low %v1740, %v1772
    %v1797 = vcombine.high %v1740, %v1772
    %v1798 = vcombine.low %v1747, %v1779
    %v1799 = vcombine.high %v1747, %v1779
    %v1800 = vcombine.low %v1756, %v1788
    %v1801 = vcombine.high %v1756, %v1788
    %v1802 = vcombine.low %v1763, %v1795
    %v1803 = vcombine.high %v1763, %v1795
    %v1804 = vcombine.low %v957, %v961
    %v1805 = vcombine.high %v957, %v961
    %v1807 = vunpack.c.l.s4 1983009808
    %v1808 = vunpack.c.0.s8 %v1807
    %v1809 = vlaneseq
    %v1810 = vshrl.u32 %v1809, 7
    %v1811 = vsub.s32 %v1808, %v1810
    %v1812 = vrot.slane %v1804, %v1811
    %v1814 = vunpack.c.l.s4 1983009808
    %v1815 = vunpack.c.0.s8 %v1814
    %v1816 = vlaneseq
    %v1817 = vshrl.u32 %v1816, 7
    %v1818 = vsub.s32 %v1815, %v1817
    %v1819 = vrot.slane %v1805, %v1818
    %v1820 = vcombine.low %v959, %v963
    %v1821 = vcombine.high %v959, %v963
    %v1823 = vunpack.c.l.s4 1983009808
    %v1824 = vunpack.c.0.s8 %v1823
    %v1825 = vlaneseq
    %v1826 = vshrl.u32 %v1825, 7
    %v1827 = vsub.s32 %v1824, %v1826
    %v1828 = vrot.slane %v1820, %v1827
    %v1830 = vunpack.c.l.s4 1983009808
    %v1831 = vunpack.c.0.s8 %v1830
    %v1832 = vlaneseq
    %v1833 = vshrl.u32 %v1832, 7
    %v1834 = vsub.s32 %v1831, %v1833
    %v1835 = vrot.slane %v1821, %v1834
    %v1836 = vcombine.low %v965, %v969
    %v1837 = vcombine.high %v965, %v969
    %v1839 = vunpack.c.l.s4 1983009808
    %v1840 = vunpack.c.0.s8 %v1839
    %v1841 = vlaneseq
    %v1842 = vshrl.u32 %v1841, 7
    %v1843 = vsub.s32 %v1840, %v1842
    %v1844 = vrot.slane %v1836, %v1843
    %v1846 = vunpack.c.l.s4 1983009808
    %v1847 = vunpack.c.0.s8 %v1846
    %v1848 = vlaneseq
    %v1849 = vshrl.u32 %v1848, 7
    %v1850 = vsub.s32 %v1847, %v1849
    %v1851 = vrot.slane %v1837, %v1850
    %v1852 = vcombine.low %v967, %v971
    %v1853 = vcombine.high %v967, %v971
    %v1855 = vunpack.c.l.s4 1983009808
    %v1856 = vunpack.c.0.s8 %v1855
    %v1857 = vlaneseq
    %v1858 = vshrl.u32 %v1857, 7
    %v1859 = vsub.s32 %v1856, %v1858
    %v1860 = vrot.slane %v1852, %v1859
    %v1862 = vunpack.c.l.s4 1983009808
    %v1863 = vunpack.c.0.s8 %v1862
    %v1864 = vlaneseq
    %v1865 = vshrl.u32 %v1864, 7
    %v1866 = vsub.s32 %v1863, %v1865
    %v1867 = vrot.slane %v1853, %v1866
    %v1868 = vcombine.low %v1812, %v1828
    %v1869 = vcombine.high %v1812, %v1828
    %v1871 = vunpack.c.l.s4 1934713408
    %v1872 = vunpack.c.0.s8 %v1871
    %v1873 = vlaneseq
    %v1874 = vshrl.u32 %v1873, 7
    %v1875 = vsub.s32 %v1872, %v1874
    %v1876 = vrot.slane %v1868, %v1875
    %v1878 = vunpack.c.l.s4 1934713408
    %v1879 = vunpack.c.0.s8 %v1878
    %v1880 = vlaneseq
    %v1881 = vshrl.u32 %v1880, 7
    %v1882 = vsub.s32 %v1879, %v1881
    %v1883 = vrot.slane %v1869, %v1882
    %v1884 = vcombine.low %v1819, %v1835
    %v1885 = vcombine.high %v1819, %v1835
    %v1887 = vunpack.c.l.s4 1934713408
    %v1888 = vunpack.c.0.s8 %v1887
    %v1889 = vlaneseq
    %v1890 = vshrl.u32 %v1889, 7
    %v1891 = vsub.s32 %v1888, %v1890
    %v1892 = vrot.slane %v1884, %v1891
    %v1894 = vunpack.c.l.s4 1934713408
    %v1895 = vunpack.c.0.s8 %v1894
    %v1896 = vlaneseq
    %v1897 = vshrl.u32 %v1896, 7
    %v1898 = vsub.s32 %v1895, %v1897
    %v1899 = vrot.slane %v1885, %v1898
    %v1900 = vcombine.low %v1844, %v1860
    %v1901 = vcombine.high %v1844, %v1860
    %v1903 = vunpack.c.l.s4 1934713408
    %v1904 = vunpack.c.0.s8 %v1903
    %v1905 = vlaneseq
    %v1906 = vshrl.u32 %v1905, 7
    %v1907 = vsub.s32 %v1904, %v1906
    %v1908 = vrot.slane %v1900, %v1907
    %v1910 = vunpack.c.l.s4 1934713408
    %v1911 = vunpack.c.0.s8 %v1910
    %v1912 = vlaneseq
    %v1913 = vshrl.u32 %v1912, 7
    %v1914 = vsub.s32 %v1911, %v1913
    %v1915 = vrot.slane %v1901, %v1914
    %v1916 = vcombine.low %v1851, %v1867
    %v1917 = vcombine.high %v1851, %v1867
    %v1919 = vunpack.c.l.s4 1934713408
    %v1920 = vunpack.c.0.s8 %v1919
    %v1921 = vlaneseq
    %v1922 = vshrl.u32 %v1921, 7
    %v1923 = vsub.s32 %v1920, %v1922
    %v1924 = vrot.slane %v1916, %v1923
    %v1926 = vunpack.c.l.s4 1934713408
    %v1927 = vunpack.c.0.s8 %v1926
    %v1928 = vlaneseq
    %v1929 = vshrl.u32 %v1928, 7
    %v1930 = vsub.s32 %v1927, %v1929
    %v1931 = vrot.slane %v1917, %v1930
    %v1932 = vcombine.low %v1876, %v1908
    %v1933 = vcombine.high %v1876, %v1908
    %v1934 = vcombine.low %v1883, %v1915
    %v1935 = vcombine.high %v1883, %v1915
    %v1936 = vcombine.low %v1892, %v1924
    %v1937 = vcombine.high %v1892, %v1924
    %v1938 = vcombine.low %v1899, %v1931
    %v1939 = vcombine.high %v1899, %v1931
    %v1940 = vcombine.low %v973, %v977
    %v1941 = vcombine.high %v973, %v977
    %v1943 = vunpack.c.l.s4 1983009808
    %v1944 = vunpack.c.0.s8 %v1943
    %v1945 = vlaneseq
    %v1946 = vshrl.u32 %v1945, 7
    %v1947 = vsub.s32 %v1944, %v1946
    %v1948 = vrot.slane %v1940, %v1947
    %v1950 = vunpack.c.l.s4 1983009808
    %v1951 = vunpack.c.0.s8 %v1950
    %v1952 = vlaneseq
    %v1953 = vshrl.u32 %v1952, 7
    %v1954 = vsub.s32 %v1951, %v1953
    %v1955 = vrot.slane %v1941, %v1954
    %v1956 = vcombine.low %v975, %v979
    %v1957 = vcombine.high %v975, %v979
    %v1959 = vunpack.c.l.s4 1983009808
    %v1960 = vunpack.c.0.s8 %v1959
    %v1961 = vlaneseq
    %v1962 = vshrl.u32 %v1961, 7
    %v1963 = vsub.s32 %v1960, %v1962
    %v1964 = vrot.slane %v1956, %v1963
    %v1966 = vunpack.c.l.s4 1983009808
    %v1967 = vunpack.c.0.s8 %v1966
    %v1968 = vlaneseq
    %v1969 = vshrl.u32 %v1968, 7
    %v1970 = vsub.s32 %v1967, %v1969
    %v1971 = vrot.slane %v1957, %v1970
    %v1972 = vcombine.low %v981, %v985
    %v1973 = vcombine.high %v981, %v985
    %v1975 = vunpack.c.l.s4 1983009808
    %v1976 = vunpack.c.0.s8 %v1975
    %v1977 = vlaneseq
    %v1978 = vshrl.u32 %v1977, 7
    %v1979 = vsub.s32 %v1976, %v1978
    %v1980 = vrot.slane %v1972, %v1979
    %v1982 = vunpack.c.l.s4 1983009808
    %v1983 = vunpack.c.0.s8 %v1982
    %v1984 = vlaneseq
    %v1985 = vshrl.u32 %v1984, 7
    %v1986 = vsub.s32 %v1983, %v1985
    %v1987 = vrot.slane %v1973, %v1986
    %v1988 = vcombine.low %v983, %v987
    %v1989 = vcombine.high %v983, %v987
    %v1991 = vunpack.c.l.s4 1983009808
    %v1992 = vunpack.c.0.s8 %v1991
    %v1993 = vlaneseq
    %v1994 = vshrl.u32 %v1993, 7
    %v1995 = vsub.s32 %v1992, %v1994
    %v1996 = vrot.slane %v1988, %v1995
    %v1998 = vunpack.c.l.s4 1983009808
    %v1999 = vunpack.c.0.s8 %v1998
    %v2000 = vlaneseq
    %v2001 = vshrl.u32 %v2000, 7
    %v2002 = vsub.s32 %v1999, %v2001
    %v2003 = vrot.slane %v1989, %v2002
    %v2004 = vcombine.low %v1948, %v1964
    %v2005 = vcombine.high %v1948, %v1964
    %v2007 = vunpack.c.l.s4 1934713408
    %v2008 = vunpack.c.0.s8 %v2007
    %v2009 = vlaneseq
    %v2010 = vshrl.u32 %v2009, 7
    %v2011 = vsub.s32 %v2008, %v2010
    %v2012 = vrot.slane %v2004, %v2011
    %v2014 = vunpack.c.l.s4 1934713408
    %v2015 = vunpack.c.0.s8 %v2014
    %v2016 = vlaneseq
    %v2017 = vshrl.u32 %v2016, 7
    %v2018 = vsub.s32 %v2015, %v2017
    %v2019 = vrot.slane %v2005, %v2018
    %v2020 = vcombine.low %v1955, %v1971
    %v2021 = vcombine.high %v1955, %v1971
    %v2023 = vunpack.c.l.s4 1934713408
    %v2024 = vunpack.c.0.s8 %v2023
    %v2025 = vlaneseq
    %v2026 = vshrl.u32 %v2025, 7
    %v2027 = vsub.s32 %v2024, %v2026
    %v2028 = vrot.slane %v2020, %v2027
    %v2030 = vunpack.c.l.s4 1934713408
    %v2031 = vunpack.c.0.s8 %v2030
    %v2032 = vlaneseq
    %v2033 = vshrl.u32 %v2032, 7
    %v2034 = vsub.s32 %v2031, %v2033
    %v2035 = vrot.slane %v2021, %v2034
    %v2036 = vcombine.low %v1980, %v1996
    %v2037 = vcombine.high %v1980, %v1996
    %v2039 = vunpack.c.l.s4 1934713408
    %v2040 = vunpack.c.0.s8 %v2039
    %v2041 = vlaneseq
    %v2042 = vshrl.u32 %v2041, 7
    %v2043 = vsub.s32 %v2040, %v2042
    %v2044 = vrot.slane %v2036, %v2043
    %v2046 = vunpack.c.l.s4 1934713408
    %v2047 = vunpack.c.0.s8 %v2046
    %v2048 = vlaneseq
    %v2049 = vshrl.u32 %v2048, 7
    %v2050 = vsub.s32 %v2047, %v2049
    %v2051 = vrot.slane %v2037, %v2050
    %v2052 = vcombine.low %v1987, %v2003
    %v2053 = vcombine.high %v1987, %v2003
    %v2055 = vunpack.c.l.s4 1934713408
    %v2056 = vunpack.c.0.s8 %v2055
    %v2057 = vlaneseq
    %v2058 = vshrl.u32 %v2057, 7
    %v2059 = vsub.s32 %v2056, %v2058
    %v2060 = vrot.slane %v2052, %v2059
    %v2062 = vunpack.c.l.s4 1934713408
    %v2063 = vunpack.c.0.s8 %v2062
    %v2064 = vlaneseq
    %v2065 = vshrl.u32 %v2064, 7
    %v2066 = vsub.s32 %v2063, %v2065
    %v2067 = vrot.slane %v2053, %v2066
    %v2068 = vcombine.low %v2012, %v2044
    %v2069 = vcombine.high %v2012, %v2044
    %v2070 = vcombine.low %v2019, %v2051
    %v2071 = vcombine.high %v2019, %v2051
    %v2072 = vcombine.low %v2028, %v2060
    %v2073 = vcombine.high %v2028, %v2060
    %v2074 = vcombine.low %v2035, %v2067
    %v2075 = vcombine.high %v2035, %v2067
    %2080 = vrot.lane.b32.xlu0 %v1117, 16
    %v2081 = vpop.permute.xlu0 %2080
    %2082 = vrot.lane.b32.xlu0 %v1253, 16
    %v2083 = vpop.permute.xlu0 %2082
    %2084 = vrot.lane.b32.xlu0 %v1389, 16
    %v2085 = vpop.permute.xlu0 %2084
    %2086 = vrot.lane.b32.xlu0 %v1525, 16
    %v2087 = vpop.permute.xlu0 %2086
    %2096 = vrot.lane.b32.xlu0 %v1118, 32
    %v2097 = vpop.permute.xlu0 %2096
    %2098 = vrot.lane.b32.xlu0 %v1254, 32
    %v2099 = vpop.permute.xlu0 %2098
    %2100 = vrot.lane.b32.xlu0 %v1390, 32
    %v2101 = vpop.permute.xlu0 %2100
    %2102 = vrot.lane.b32.xlu0 %v1526, 32
    %v2103 = vpop.permute.xlu0 %2102
    %2112 = vrot.lane.b32.xlu0 %v1119, 48
    %v2113 = vpop.permute.xlu0 %2112
    %2114 = vrot.lane.b32.xlu0 %v1255, 48
    %v2115 = vpop.permute.xlu0 %2114
    %2116 = vrot.lane.b32.xlu0 %v1391, 48
    %v2117 = vpop.permute.xlu0 %2116
    %2118 = vrot.lane.b32.xlu0 %v1527, 48
    %v2119 = vpop.permute.xlu0 %2118
    %2128 = vrot.lane.b32.xlu0 %v1120, 64
    %v2129 = vpop.permute.xlu0 %2128
    %2130 = vrot.lane.b32.xlu0 %v1256, 64
    %v2131 = vpop.permute.xlu0 %2130
    %2132 = vrot.lane.b32.xlu0 %v1392, 64
    %v2133 = vpop.permute.xlu0 %2132
    %2134 = vrot.lane.b32.xlu0 %v1528, 64
    %v2135 = vpop.permute.xlu0 %2134
    %2144 = vrot.lane.b32.xlu0 %v1121, 80
    %v2145 = vpop.permute.xlu0 %2144
    %2146 = vrot.lane.b32.xlu0 %v1257, 80
    %v2147 = vpop.permute.xlu0 %2146
    %2148 = vrot.lane.b32.xlu0 %v1393, 80
    %v2149 = vpop.permute.xlu0 %2148
    %2150 = vrot.lane.b32.xlu0 %v1529, 80
    %v2151 = vpop.permute.xlu0 %2150
    %2160 = vrot.lane.b32.xlu0 %v1122, 96
    %v2161 = vpop.permute.xlu0 %2160
    %2162 = vrot.lane.b32.xlu0 %v1258, 96
    %v2163 = vpop.permute.xlu0 %2162
    %2164 = vrot.lane.b32.xlu0 %v1394, 96
    %v2165 = vpop.permute.xlu0 %2164
    %2166 = vrot.lane.b32.xlu0 %v1530, 96
    %v2167 = vpop.permute.xlu0 %2166
    %2176 = vrot.lane.b32.xlu0 %v1123, 112
    %v2177 = vpop.permute.xlu0 %2176
    %2178 = vrot.lane.b32.xlu0 %v1259, 112
    %v2179 = vpop.permute.xlu0 %2178
    %2180 = vrot.lane.b32.xlu0 %v1395, 112
    %v2181 = vpop.permute.xlu0 %2180
    %2182 = vrot.lane.b32.xlu0 %v1531, 112
    %v2183 = vpop.permute.xlu0 %2182
    %2192 = vrot.lane.b32.xlu0 %v1661, 16
    %v2193 = vpop.permute.xlu0 %2192
    %2194 = vrot.lane.b32.xlu0 %v1797, 16
    %v2195 = vpop.permute.xlu0 %2194
    %2196 = vrot.lane.b32.xlu0 %v1933, 16
    %v2197 = vpop.permute.xlu0 %2196
    %2198 = vrot.lane.b32.xlu0 %v2069, 16
    %v2199 = vpop.permute.xlu0 %2198
    %2208 = vrot.lane.b32.xlu0 %v1662, 32
    %v2209 = vpop.permute.xlu0 %2208
    %2210 = vrot.lane.b32.xlu0 %v1798, 32
    %v2211 = vpop.permute.xlu0 %2210
    %2212 = vrot.lane.b32.xlu0 %v1934, 32
    %v2213 = vpop.permute.xlu0 %2212
    %2214 = vrot.lane.b32.xlu0 %v2070, 32
    %v2215 = vpop.permute.xlu0 %2214
    %2224 = vrot.lane.b32.xlu0 %v1663, 48
    %v2225 = vpop.permute.xlu0 %2224
    %2226 = vrot.lane.b32.xlu0 %v1799, 48
    %v2227 = vpop.permute.xlu0 %2226
    %2228 = vrot.lane.b32.xlu0 %v1935, 48
    %v2229 = vpop.permute.xlu0 %2228
    %2230 = vrot.lane.b32.xlu0 %v2071, 48
    %v2231 = vpop.permute.xlu0 %2230
    %2240 = vrot.lane.b32.xlu0 %v1664, 64
    %v2241 = vpop.permute.xlu0 %2240
    %2242 = vrot.lane.b32.xlu0 %v1800, 64
    %v2243 = vpop.permute.xlu0 %2242
    %2244 = vrot.lane.b32.xlu0 %v1936, 64
    %v2245 = vpop.permute.xlu0 %2244
    %2246 = vrot.lane.b32.xlu0 %v2072, 64
    %v2247 = vpop.permute.xlu0 %2246
    %2256 = vrot.lane.b32.xlu0 %v1665, 80
    %v2257 = vpop.permute.xlu0 %2256
    %2258 = vrot.lane.b32.xlu0 %v1801, 80
    %v2259 = vpop.permute.xlu0 %2258
    %2260 = vrot.lane.b32.xlu0 %v1937, 80
    %v2261 = vpop.permute.xlu0 %2260
    %2262 = vrot.lane.b32.xlu0 %v2073, 80
    %v2263 = vpop.permute.xlu0 %2262
    %2272 = vrot.lane.b32.xlu0 %v1666, 96
    %v2273 = vpop.permute.xlu0 %2272
    %2274 = vrot.lane.b32.xlu0 %v1802, 96
    %v2275 = vpop.permute.xlu0 %2274
    %2276 = vrot.lane.b32.xlu0 %v1938, 96
    %v2277 = vpop.permute.xlu0 %2276
    %2278 = vrot.lane.b32.xlu0 %v2074, 96
    %v2279 = vpop.permute.xlu0 %2278
    %2288 = vrot.lane.b32.xlu0 %v1667, 112
    %v2289 = vpop.permute.xlu0 %2288
    %2290 = vrot.lane.b32.xlu0 %v1803, 112
    %v2291 = vpop.permute.xlu0 %2290
    %2292 = vrot.lane.b32.xlu0 %v1939, 112
    %v2293 = vpop.permute.xlu0 %2292
    %2294 = vrot.lane.b32.xlu0 %v2075, 112
    %v2295 = vpop.permute.xlu0 %2294
    %vm2300 = vcmask 130048
    %v2301 = vsel %vm2300, %v1116, %v2081
    %v2302 = vsel %vm2300, %v1252, %v2083
    %v2303 = vsel %vm2300, %v1388, %v2085
    %v2304 = vsel %vm2300, %v1524, %v2087
    %vm2305 = vcmask 261120
    %v2306 = vsel %vm2305, %v2301, %v2097
    %v2307 = vsel %vm2305, %v2302, %v2099
    %v2308 = vsel %vm2305, %v2303, %v2101
    %v2309 = vsel %vm2305, %v2304, %v2103
    %vm2310 = vcmask 392192
    %v2311 = vsel %vm2310, %v2306, %v2113
    %v2312 = vsel %vm2310, %v2307, %v2115
    %v2313 = vsel %vm2310, %v2308, %v2117
    %v2314 = vsel %vm2310, %v2309, %v2119
    %v2315 = vsel %vm306, %v2311, %v2129
    %v2316 = vsel %vm306, %v2312, %v2131
    %v2317 = vsel %vm306, %v2313, %v2133
    %v2318 = vsel %vm306, %v2314, %v2135
    %vm2319 = vcmask 654336
    %v2320 = vsel %vm2319, %v2315, %v2145
    %v2321 = vsel %vm2319, %v2316, %v2147
    %v2322 = vsel %vm2319, %v2317, %v2149
    %v2323 = vsel %vm2319, %v2318, %v2151
    %vm2324 = vcmask 785408
    %v2325 = vsel %vm2324, %v2320, %v2161
    %v2326 = vsel %vm2324, %v2321, %v2163
    %v2327 = vsel %vm2324, %v2322, %v2165
    %v2328 = vsel %vm2324, %v2323, %v2167
    %vm2329 = vcmask 916480
    %v2330 = vsel %vm2329, %v2325, %v2177
    %v2331 = vsel %vm2329, %v2326, %v2179
    %v2332 = vsel %vm2329, %v2327, %v2181
    %v2333 = vsel %vm2329, %v2328, %v2183
    %v2334 = vsel %vm2300, %v1660, %v2193
    %v2335 = vsel %vm2300, %v1796, %v2195
    %v2336 = vsel %vm2300, %v1932, %v2197
    %v2337 = vsel %vm2300, %v2068, %v2199
    %v2338 = vsel %vm2305, %v2334, %v2209
    %v2339 = vsel %vm2305, %v2335, %v2211
    %v2340 = vsel %vm2305, %v2336, %v2213
    %v2341 = vsel %vm2305, %v2337, %v2215
    %v2342 = vsel %vm2310, %v2338, %v2225
    %v2343 = vsel %vm2310, %v2339, %v2227
    %v2344 = vsel %vm2310, %v2340, %v2229
    %v2345 = vsel %vm2310, %v2341, %v2231
    %v2346 = vsel %vm306, %v2342, %v2241
    %v2347 = vsel %vm306, %v2343, %v2243
    %v2348 = vsel %vm306, %v2344, %v2245
    %v2349 = vsel %vm306, %v2345, %v2247
    %v2350 = vsel %vm2319, %v2346, %v2257
    %v2351 = vsel %vm2319, %v2347, %v2259
    %v2352 = vsel %vm2319, %v2348, %v2261
    %v2353 = vsel %vm2319, %v2349, %v2263
    %v2354 = vsel %vm2324, %v2350, %v2273
    %v2355 = vsel %vm2324, %v2351, %v2275
    %v2356 = vsel %vm2324, %v2352, %v2277
    %v2357 = vsel %vm2324, %v2353, %v2279
    %v2358 = vsel %vm2329, %v2354, %v2289
    %v2359 = vsel %vm2329, %v2355, %v2291
    %v2360 = vsel %vm2329, %v2356, %v2293
    %v2361 = vsel %vm2329, %v2357, %v2295
    %2364 = vrot.lane.b32.xlu0 %v526, 16
    %v2365 = vpop.permute.xlu0 %2364
    %2366 = vrot.lane.b32.xlu0 %v596, 16
    %v2367 = vpop.permute.xlu0 %2366
    %v2370 = vsel %vm2300, %v377, %v2365
    %v2371 = vsel %vm2300, %v447, %v2367
    %v2373 = vsel %vm2305, %v2370, 0
    %v2376 = vsel %vm2305, %v2371, 0
    %2378 = vmatprep.subr.mxu0 %v2358
    %2379 = vmatpush1.msra.mxu0 %v2330
    %2380 = vmatprep.subr.mxu0 %v2359
    %2381 = vmatpush1.msra.mxu0 %v2331
    %2382 = vmatprep.subr.mxu0 %v2360
    %2383 = vmatpush1.msra.mxu0 %v2332
    %2384 = vmatprep.subr.mxu0 %v2361
    %2385 = vmatpush1.msra.mxu0 %v2333
    %2386 = vmatprep.subr.mxu0 0.0
    %2387 = vmatpush1.msra.mxu0 0.0
    %2388 = vmatprep.subr.mxu0 0.0
    %2389 = vmatpush1.msra.mxu0 0.0
    %2390 = vmatprep.subr.mxu0 0.0
    %2391 = vmatpush1.msra.mxu0 0.0
    %2392 = vmatprep.subr.mxu0 0.0
    %2393 = vmatpush1.msra.mxu0 0.0
    %2394 = vmatprep.subr.mxu0 0.0
    %2395 = vmatpush1.msra.mxu0 0.0
    %2396 = vmatprep.subr.mxu0 0.0
    %2397 = vmatpush1.msra.mxu0 0.0
    %2398 = vmatprep.subr.mxu0 0.0
    %2399 = vmatpush1.msra.mxu0 0.0
    %2400 = vmatprep.subr.mxu0 0.0
    %2401 = vmatpush1.msra.mxu0 0.0
    %2402 = vmatprep.subr.mxu0 0.0
    %2403 = vmatpush1.msra.mxu0 0.0
    %2404 = vmatprep.subr.mxu0 0.0
    %2405 = vmatpush1.msra.mxu0 0.0
    %2406 = vmatprep.subr.mxu0 0.0
    %2407 = vmatpush1.msra.mxu0 0.0
    %2408 = vmatprep.subr.mxu0 0.0
    %2409 = vmatpush1.msra.mxu0 0.0
    %2410 = vmatprep.subr.mxu0 0.0
    %2411 = vmatpush1.msra.mxu0 0.0
    %2412 = vmatprep.subr.mxu0 0.0
    %2413 = vmatpush1.msra.mxu0 0.0
    %2414 = vmatprep.subr.mxu0 0.0
    %2415 = vmatpush1.msra.mxu0 0.0
    %2416 = vmatprep.subr.mxu0 0.0
    %2417 = vmatpush1.msra.mxu0 0.0
    %2418 = vmatprep.subr.mxu0 0.0
    %2419 = vmatpush1.msra.mxu0 0.0
    %2420 = vmatprep.subr.mxu0 0.0
    %2421 = vmatpush1.msra.mxu0 0.0
    %2422 = vmatprep.subr.mxu0 0.0
    %2423 = vmatpush1.msra.mxu0 0.0
    %2424 = vmatprep.subr.mxu0 0.0
    %2425 = vmatpush1.msra.mxu0 0.0
    %2426 = vmatprep.subr.mxu0 0.0
    %2427 = vmatpush1.msra.mxu0 0.0
    %2428 = vmatprep.subr.mxu0 0.0
    %2429 = vmatpush1.msra.mxu0 0.0
    %2430 = vmatprep.subr.mxu0 0.0
    %2431 = vmatpush1.msra.mxu0 0.0
    %2432 = vmatprep.subr.mxu0 0.0
    %2433 = vmatpush1.msra.mxu0 0.0
    %2434 = vmatprep.subr.mxu0 0.0
    %2435 = vmatpush1.msra.mxu0 0.0
    %2436 = vmatprep.subr.mxu0 0.0
    %2437 = vmatpush1.msra.mxu0 0.0
    %2438 = vmatprep.subr.mxu0 0.0
    %2439 = vmatpush1.msra.mxu0 0.0
    %2440 = vmatprep.subr.mxu0 0.0
    %2441 = vmatpush1.msra.mxu0 0.0
    %2442 = vmatprep.mubr.f32.mxu0 0.0
    %2443 = vmatmul.mubr.f32.gmra.mrb[0].mxu0 %v2373
    %v2444 = vpop.f32.mrb[0].mxu0
    %v2445 = vadd.f32 0.0, %v2444
    %v2446 = vpop.f32.mrb[0].mxu0
    %v2447 = vadd.f32 0.0, %v2446
    %2448 = vmatprep.mubr.f32.mxu0 0.0
    %2449 = vmatmul.mubr.f32.gmra.mrb[0].mxu0 %v2376
    %v2450 = vpop.f32.mrb[0].mxu0
    %v2451 = vadd.f32 0.0, %v2450
    %v2452 = vpop.f32.mrb[0].mxu0
    %v2453 = vadd.f32 0.0, %v2452
    %2454 = vdwg.mxu0
    %2455 = vst [vmem:[#allocation5] sm:$0xff] %v2445
    %2456 = vst [vmem:[#allocation5 + $0x8] sm:$0xff] %v2447
    %2457 = vst [vmem:[#allocation5 + $0x10] sm:$0xff] %v2451
    %2458 = vst [vmem:[#allocation5 + $0x18] sm:$0xff] %v2453
    // Predicated region
    $region22: #{tpu_custom_call.1} parent=1 // pred_check
      _
    $region23: #{tpu_custom_call.1} parent=1 // pred_check_branch
      %2460 = sbr.rel (0) target = $region25
    $region24: #{tpu_custom_call.1} parent=1 // pred_region
      %s2462 = ssub.s32 512, 512
      %2463 = vsyncadd [#allocation4], %s2462
      %s2464 = sshll.u32 [#allocation5], 4
      %s2465 = int_to_ptr.vmem [resolvable:$true] %s2464
      %2470 = dma.vmem_to_hbm [thread:$0]  %s2465, 512, %s4, [#allocation4], 256, 256, 16
    $region25: #{tpu_custom_call.1} parent=1 // pred_fallthru
      _
    // Predicated region
    $region26: #{tpu_custom_call.1} parent=1 // pred_check
      _
    $region27: #{tpu_custom_call.1} parent=1 // pred_check_branch
      %2472 = sbr.rel (0) target = $region29
    $region28: #{tpu_custom_call.1} parent=1 // pred_region
      %2473 = dma.done [#allocation4], 512
    $region29: #{tpu_custom_call.1} parent=1 // pred_fallthru
      _
    %2474 = vsyncpa [#allocation3], 1
    %2475 = vsyncpa [#allocation4], 1

</llo_original>
